<compile_context>
chip_gen: v5e
topology: v5e:2x2
jax: 0.10.0
libtpu: 0.0.40
codegen_flags: <defaults>
</compile_context>

<pallas_src>
from functools import partial

import numpy as np
import jax
import jax.numpy as jnp
from jax.experimental import pallas as pl
from jax.experimental.pallas import tpu as pltpu

EPS = 1e-4                      # matches normalize(..., eps=1e-4)
_LANE = 128
_SUBLANE = 8
_TARGET_TILE_ROWS = 512         # ~rows of the im2col matrix per grid step
_VMEM_LIMIT = 64 * 1024 * 1024


def _round_up(x, m):
    return (x + m - 1) // m * m


def _largest_divisor_leq(n, cap):
    cap = max(1, min(n, cap))
    for d in range(cap, 0, -1):
        if n % d == 0:
            return d
    return 1


def _normalized_weight(weight, gain):
    """normalize(w) * gain / sqrt(fan_in), in fp32 (matches the PyTorch forward)."""
    w = weight.astype(jnp.float32)
    dims = tuple(range(1, w.ndim))
    fan_in = int(np.prod(w.shape[1:]))
    norm = jnp.sqrt(jnp.sum(w * w, axis=dims, keepdims=True))
    norm = EPS + norm * (1.0 / np.sqrt(fan_in))
    return (w / norm) * (float(gain) / np.sqrt(fan_in))


# ----------------------------------------------------------------------------
# conv2d path (weight.ndim == 4)
# ----------------------------------------------------------------------------
def _mpconv_kernel(x_ref, w_ref, o_ref, *, tile_ho, wo, kh, kw):
    # x_ref: [1, Hp, Wp, Cin]        full padded image (resident across H-tiles)
    # w_ref: [kh*kw*Cin, Cout_pad]   pre-normalized, lane-dense weight matrix
    # o_ref: [1, tile_ho, Wo, Cout_pad]
    cin = x_ref.shape[3]
    cout_pad = w_ref.shape[1]
    t = pl.program_id(1)
    row0 = pl.multiple_of(t * tile_ho, tile_ho)

    # Load the halo'd row window once, then build the im2col block with static
    # slices + a single lane-dim concat -> one deep MXU contraction.
    xwin = x_ref[0, pl.ds(row0, tile_ho + kh - 1), :, :]     # [tile_ho+kh-1, Wp, Cin]
    cols = []
    for dy in range(kh):
        rows = xwin[dy:dy + tile_ho]                          # [tile_ho, Wp, Cin]
        for dx in range(kw):
            cols.append(rows[:, dx:dx + wo, :])               # [tile_ho, Wo, Cin]
    patches = jnp.concatenate(cols, axis=-1)                  # [tile_ho, Wo, KK*Cin]
    patches = patches.reshape(tile_ho * wo, kh * kw * cin)

    acc = jnp.dot(patches, w_ref[...], preferred_element_type=jnp.float32)
    o_ref[...] = acc.reshape(1, tile_ho, wo, cout_pad).astype(o_ref.dtype)


def _mpconv2d_forward(x, weight, gain):
    n, cin, h, w_sp = x.shape
    cout, cin_w, kh, kw = weight.shape
    assert cin == cin_w
    p = kw // 2                     # F.conv2d(x, w, padding=(kw // 2,)) -> same pad both dims
    ho = h + 2 * p - kh + 1
    wo = w_sp + 2 * p - kw + 1
    hp, wp = h + 2 * p, w_sp + 2 * p
    cout_pad = _round_up(cout, _LANE)

    # --- weight: normalize once (fp32), im2col layout, lane-dense padded Cout ---
    wn = _normalized_weight(weight, gain)                                # [Cout, Cin, kh, kw]
    w2d = jnp.transpose(wn, (2, 3, 1, 0)).reshape(kh * kw * cin, cout)   # [(dy,dx,ci), co]
    w2d = jnp.pad(w2d, ((0, 0), (0, cout_pad - cout))).astype(x.dtype)

    # --- activations: NCHW -> NHWC + zero pad (once, in the wrapper) ---
    # TODO(synk): keeping NHWC end-to-end in the surrounding model and folding the
    # zero padding / halo-DMA input tiling into the kernel would remove 2-3
    # full-tensor HBM passes; kept as-is for PyTorch NCHW interface fidelity.
    x_nhwc = jnp.transpose(x, (0, 2, 3, 1))
    x_pad = jnp.pad(x_nhwc, ((0, 0), (p, p), (p, p), (0, 0)))

    # --- spatial tiling over output rows (bounds per-step output/compute VMEM) ---
    tile_ho = _largest_divisor_leq(ho, max(1, _TARGET_TILE_ROWS // max(wo, 1)))
    n_tiles = ho // tile_ho

    cost = pl.CostEstimate(
        flops=2 * n * ho * wo * kh * kw * cin * cout_pad,
        transcendentals=0,
        bytes_accessed=(x_pad.size * x_pad.dtype.itemsize
                        + w2d.size * w2d.dtype.itemsize
                        + n * ho * wo * cout_pad * x.dtype.itemsize))

    out_nhwc = pl.pallas_call(
        partial(_mpconv_kernel, tile_ho=tile_ho, wo=wo, kh=kh, kw=kw),
        out_shape=jax.ShapeDtypeStruct((n, ho, wo, cout_pad), x.dtype),
        grid=(n, n_tiles),
        in_specs=[
            pl.BlockSpec((1, hp, wp, cin), lambda b, t: (b, 0, 0, 0)),
            pl.BlockSpec((kh * kw * cin, cout_pad), lambda b, t: (0, 0)),
        ],
        out_specs=pl.BlockSpec((1, tile_ho, wo, cout_pad), lambda b, t: (b, t, 0, 0)),
        compiler_params=pltpu.CompilerParams(
            dimension_semantics=("parallel", "parallel"),
            vmem_limit_bytes=_VMEM_LIMIT),
        cost_estimate=cost,
    )(x_pad, w2d)

    out = out_nhwc[..., :cout]                      # drop lane padding
    return jnp.transpose(out, (0, 3, 1, 2))         # NHWC -> NCHW


# ----------------------------------------------------------------------------
# linear path (weight.ndim == 2):  x @ normalize(w).T
# ----------------------------------------------------------------------------
def _mplinear_kernel(x_ref, w_ref, o_ref):
    # x_ref: [TM, Din], w_ref: [Din, Dout_pad] (pre-transposed), o_ref: [TM, Dout_pad]
    o_ref[...] = jnp.dot(
        x_ref[...], w_ref[...], preferred_element_type=jnp.float32
    ).astype(o_ref.dtype)


def _mplinear_forward(x, weight, gain):
    b, din = x.shape
    dout, din_w = weight.shape
    assert din == din_w
    dout_pad = _round_up(dout, _LANE)

    wn = _normalized_weight(weight, gain)                     # [Dout, Din] fp32
    wn = jnp.pad(wn, ((0, dout_pad - dout), (0, 0)))
    w_t = jnp.transpose(wn, (1, 0)).astype(x.dtype)           # [Din, Dout_pad]

    tm = min(256, _round_up(b, _SUBLANE))
    b_pad = _round_up(b, tm)
    x_p = jnp.pad(x, ((0, b_pad - b), (0, 0))) if b_pad != b else x

    cost = pl.CostEstimate(
        flops=2 * b_pad * din * dout_pad,
        transcendentals=0,
        bytes_accessed=(x_p.size * x_p.dtype.itemsize
                        + w_t.size * w_t.dtype.itemsize
                        + b_pad * dout_pad * x.dtype.itemsize))

    out = pl.pallas_call(
        _mplinear_kernel,
        out_shape=jax.ShapeDtypeStruct((b_pad, dout_pad), x.dtype),
        grid=(b_pad // tm,),
        in_specs=[
            pl.BlockSpec((tm, din), lambda i: (i, 0)),
            pl.BlockSpec((din, dout_pad), lambda i: (0, 0)),
        ],
        out_specs=pl.BlockSpec((tm, dout_pad), lambda i: (i, 0)),
        compiler_params=pltpu.CompilerParams(
            dimension_semantics=("parallel",),
            vmem_limit_bytes=_VMEM_LIMIT),
        cost_estimate=cost,
    )(x_p, w_t)
    return out[:b, :dout]


# ----------------------------------------------------------------------------
# wrapper (PyTorch-compatible NCHW / (Cout, Cin, kh, kw) interface)
# ----------------------------------------------------------------------------
def mpconv_forward(x, weight, gain=1.0):
    # TODO(synk): training-mode in-place self.weight.copy_(normalize(w)) is a
    # parameter side effect only; it does not change the forward output and is
    # not reproduced here.
    if weight.ndim == 2:
        return _mplinear_forward(x, weight, gain)
    assert weight.ndim == 4
    return _mpconv2d_forward(x, weight, gain)


# ----------------------------------------------------------------------------
# pure-JAX reference (mirrors the PyTorch forward exactly)
# ----------------------------------------------------------------------------
def mpconv_ref(x, weight, gain=1.0):
    w = weight.astype(jnp.float32)
    dims = tuple(range(1, w.ndim))
    norm = jnp.sqrt(jnp.sum(w * w, axis=dims, keepdims=True))
    fan_in = int(np.prod(w.shape[1:]))
    norm = EPS + norm * (1.0 / np.sqrt(fan_in))
    w = (w / norm) * (float(gain) / np.sqrt(fan_in))
    w = w.astype(x.dtype)
    if w.ndim == 2:
        return jnp.dot(x, w.T, precision=jax.lax.Precision.HIGHEST)
    p = w.shape[-1] // 2
    return jax.lax.conv_general_dilated(
        x, w, window_strides=(1, 1), padding=((p, p), (p, p)),
        dimension_numbers=("NCHW", "OIHW", "NCHW"),
        precision=jax.lax.Precision.HIGHEST)


if __name__ == "__main__":
    key = jax.random.PRNGKey(0)
    k1, k2, k3, k4, k5, k6 = jax.random.split(key, 6)

    # conv case 1: MPConv(in_channels=4, out_channels=8, kernel=(3, 3)), 1 H-tile
    x = jax.random.normal(k1, (2, 4, 16, 16), dtype=jnp.float32)
    w = jax.random.normal(k2, (8, 4, 3, 3), dtype=jnp.float32)
    out = jax.block_until_ready(mpconv_forward(x, w, gain=1.0))
    ref = mpconv_ref(x, w, gain=1.0)
    np.testing.assert_allclose(np.asarray(out), np.asarray(ref), rtol=1e-4, atol=1e-4)

    # conv case 2: larger spatial size -> exercises multi-H-tile grid and gain != 1
    x2 = jax.random.normal(k3, (2, 8, 32, 32), dtype=jnp.float32)
    w2 = jax.random.normal(k4, (8, 8, 3, 3), dtype=jnp.float32)
    out2 = jax.block_until_ready(mpconv_forward(x2, w2, gain=1.5))
    ref2 = mpconv_ref(x2, w2, gain=1.5)
    np.testing.assert_allclose(np.asarray(out2), np.asarray(ref2), rtol=1e-4, atol=1e-4)

    # linear case: MPConv(in_channels=32, out_channels=16, kernel=())
    x3 = jax.random.normal(k5, (8, 32), dtype=jnp.float32)
    w3 = jax.random.normal(k6, (16, 32), dtype=jnp.float32)
    out3 = jax.block_until_ready(mpconv_forward(x3, w3, gain=1.0))
    ref3 = mpconv_ref(x3, w3, gain=1.0)
    np.testing.assert_allclose(np.asarray(out3), np.asarray(ref3), rtol=1e-4, atol=1e-4)

    print("KERNEL_OK")
</pallas_src>

<mosaic_0001>
module attributes {stable_mosaic.version = 11 : i64} {
  func.func @_mpconv_kernel(%arg0: i32, %arg1: i32, %arg2: memref<1x18x18x4xf32, #tpu.memory_space<vmem>>, %arg3: memref<36x128xf32, #tpu.memory_space<vmem>>, %arg4: memref<1x16x16x128xf32, #tpu.memory_space<vmem>>) attributes {dimension_semantics = [#tpu.dimension_semantics<parallel>, #tpu.dimension_semantics<parallel>], iteration_bounds = array<i64: 2, 1>, scalar_prefetch = 0 : i64, scratch_operands = 0 : i64, tpu.core_type = #tpu.core_type<tc>, window_params = [{transform_indices = @transform_0, window_bounds = array<i64: 1, 18, 18, 4>}, {pipeline_mode = #tpu.pipeline_mode<synchronous>, transform_indices = @transform_1, window_bounds = array<i64: 36, 128>}, {transform_indices = @transform_2, window_bounds = array<i64: 1, 16, 16, 128>}]} {
    %c16_i32 = arith.constant 16 : i32
    %0 = arith.muli %arg1, %c16_i32 : i32
    %1 = tpu.assume_multiple %0, 16 : i32
    %c0 = arith.constant 0 : index
    %2 = arith.index_cast %1 : i32 to index
    %c0_0 = arith.constant 0 : index
    %c0_1 = arith.constant 0 : index
    %3 = vector.load %arg2[%c0, %2, %c0_0, %c0_1] : memref<1x18x18x4xf32, #tpu.memory_space<vmem>>, vector<1x18x18x4xf32>
    %4 = vector.shape_cast %3 : vector<1x18x18x4xf32> to vector<18x18x4xf32>
    %5 = vector.extract_strided_slice %4 {offsets = [0, 0, 0], sizes = [16, 18, 4], strides = [1, 1, 1]} : vector<18x18x4xf32> to vector<16x18x4xf32>
    %6 = vector.extract_strided_slice %5 {offsets = [0, 0, 0], sizes = [16, 16, 4], strides = [1, 1, 1]} : vector<16x18x4xf32> to vector<16x16x4xf32>
    %7 = vector.extract_strided_slice %5 {offsets = [0, 1, 0], sizes = [16, 16, 4], strides = [1, 1, 1]} : vector<16x18x4xf32> to vector<16x16x4xf32>
    %8 = vector.extract_strided_slice %5 {offsets = [0, 2, 0], sizes = [16, 16, 4], strides = [1, 1, 1]} : vector<16x18x4xf32> to vector<16x16x4xf32>
    %9 = vector.extract_strided_slice %4 {offsets = [1, 0, 0], sizes = [16, 18, 4], strides = [1, 1, 1]} : vector<18x18x4xf32> to vector<16x18x4xf32>
    %10 = vector.extract_strided_slice %9 {offsets = [0, 0, 0], sizes = [16, 16, 4], strides = [1, 1, 1]} : vector<16x18x4xf32> to vector<16x16x4xf32>
    %11 = vector.extract_strided_slice %9 {offsets = [0, 1, 0], sizes = [16, 16, 4], strides = [1, 1, 1]} : vector<16x18x4xf32> to vector<16x16x4xf32>
    %12 = vector.extract_strided_slice %9 {offsets = [0, 2, 0], sizes = [16, 16, 4], strides = [1, 1, 1]} : vector<16x18x4xf32> to vector<16x16x4xf32>
    %13 = vector.extract_strided_slice %4 {offsets = [2, 0, 0], sizes = [16, 18, 4], strides = [1, 1, 1]} : vector<18x18x4xf32> to vector<16x18x4xf32>
    %14 = vector.extract_strided_slice %13 {offsets = [0, 0, 0], sizes = [16, 16, 4], strides = [1, 1, 1]} : vector<16x18x4xf32> to vector<16x16x4xf32>
    %15 = vector.extract_strided_slice %13 {offsets = [0, 1, 0], sizes = [16, 16, 4], strides = [1, 1, 1]} : vector<16x18x4xf32> to vector<16x16x4xf32>
    %16 = vector.extract_strided_slice %13 {offsets = [0, 2, 0], sizes = [16, 16, 4], strides = [1, 1, 1]} : vector<16x18x4xf32> to vector<16x16x4xf32>
    %17 = tpu.concatenate %6, %7, %8, %10, %11, %12, %14, %15, %16 in 2 : vector<16x16x4xf32>, vector<16x16x4xf32>, vector<16x16x4xf32>, vector<16x16x4xf32>, vector<16x16x4xf32>, vector<16x16x4xf32>, vector<16x16x4xf32>, vector<16x16x4xf32>, vector<16x16x4xf32> -> vector<16x16x36xf32>
    %18 = vector.shape_cast %17 : vector<16x16x36xf32> to vector<256x36xf32>
    %c0_2 = arith.constant 0 : index
    %c0_3 = arith.constant 0 : index
    %19 = vector.load %arg3[%c0_2, %c0_3] : memref<36x128xf32, #tpu.memory_space<vmem>>, vector<36x128xf32>
    %cst = arith.constant dense<0.000000e+00> : vector<256x128xf32>
    %20 = tpu.matmul %18, %19, %cst {dimension_numbers = #tpu.dot_dimension_numbers<[1], [0], [0], [1], [0, 0, 1, 1], [], []>} : vector<256x36xf32>, vector<36x128xf32>, vector<256x128xf32> -> vector<256x128xf32>
    %21 = vector.shape_cast %20 : vector<256x128xf32> to vector<1x16x16x128xf32>
    %c0_4 = arith.constant 0 : index
    %c0_5 = arith.constant 0 : index
    %c0_6 = arith.constant 0 : index
    %c0_7 = arith.constant 0 : index
    %22 = vector.load %arg4[%c0_4, %c0_5, %c0_6, %c0_7] : memref<1x16x16x128xf32, #tpu.memory_space<vmem>>, vector<1x16x16x128xf32>
    tpu.vector_store %arg4[%c0_4, %c0_5, %c0_6, %c0_7], %21 {strides = array<i32>} : memref<1x16x16x128xf32, #tpu.memory_space<vmem>>, vector<1x16x16x128xf32>,
    return
  }
  func.func @transform_0(%arg0: i32, %arg1: i32) -> (i32, i32, i32, i32) {
    %c0_i32 = arith.constant 0 : i32
    %c0_i32_0 = arith.constant 0 : i32
    %c0_i32_1 = arith.constant 0 : i32
    %c0_i32_2 = arith.constant 0 : i32
    return %arg0, %c0_i32, %c0_i32_0, %c0_i32_1 : i32, i32, i32, i32
  }
  func.func @transform_1(%arg0: i32, %arg1: i32) -> (i32, i32) {
    %c0_i32 = arith.constant 0 : i32
    %c0_i32_0 = arith.constant 0 : i32
    %c0_i32_1 = arith.constant 0 : i32
    return %c0_i32, %c0_i32_0 : i32, i32
  }
  func.func @transform_2(%arg0: i32, %arg1: i32) -> (i32, i32, i32, i32) {
    %c0_i32 = arith.constant 0 : i32
    %c0_i32_0 = arith.constant 0 : i32
    %c0_i32_1 = arith.constant 0 : i32
    return %arg0, %arg1, %c0_i32, %c0_i32_0 : i32, i32, i32, i32
  }
}

</mosaic_0001>

<llo_original>
// kernel: tpu_custom_call.1
$region0: #{tpu_custom_call.1}
  #allocation0 [shape = 'u32[]', space=smem, size = 0x4, offset = 0x4, fixed_abs, tag = 'smem constant byte address 0x4 - core index']
  #allocation1 [shape = 'u32[72,128]{1,0:T(1,128)}', space=vmem, size = 0x9000, scoped, tag = 'internal scratch']
  %s0 = inlined_call_operand.vmem [shape: f32[2,18,18,4], index: 0, kind: input, shape index: {}]
  %s1 = inlined_call_operand.vmem [shape: f32[36,128], index: 1, kind: input, shape index: {}]
  %s2 = inlined_call_operand.hbm [shape: f32[2,16,16,128], index: 2, kind: output, shape index: {}]
  %s3 = sld [smem:[#allocation0]]
  $region41: #{tpu_custom_call.1} parent=0
    _
  %s5 = ssub.s32 1, %s3
  %s6 = scalar_select 0, %s5, %s3
  $region1: #{tpu_custom_call.1} parent=0
    #allocation2 [shape = 'u8[262144]{0}', space=vmem, size = 0x40000, scoped, tag = 'output window, operand 0']
    #allocation3 [shape = 's32[2]{0}', space=sflag, size = 0x8, scoped, tag = 'scoped memory for tpu_custom_call.1']
    %7 = vsyncpa [#allocation3], 0
    %s8 = scalar_lea.sflag [#allocation3], 1
    %9 = vsyncpa %s8, 0
    loop: start=0, step=1, limit=4
    $region2: #{tpu_custom_call.1} parent=1 // loop_pre_header
      _
    $region3: #{tpu_custom_call.1} parent=1 // loop_header
      %s11 = sphi 0, %s15
      %p12 = scmp.ge.s32.totalorder %s11, 4
      %s18 = sphi 0, %s30
      %s19 = sphi 0, %s26
      %s20 = sphi 0, %s18
      %s21 = sphi 0, %s19
      %s22 = sphi 0, %s20
      %s23 = sphi 0, %s21
      %s33 = sphi 0, %s35
      %s36 = sphi 0, %s33
      %s37 = sphi 0, %s36
      %s53 = sphi 0, %s37
      %s57 = sphi 0, %s57
      %s59 = sphi 0, %s57
      %s60 = sphi 0, %s59
      %s74 = sphi 0, %s60
      %s82 = sphi 0, %s84
      %s85 = sphi 0, %s82
      %s86 = sphi 0, %s85
      %s102 = sphi 0, %s86
    $region4: #{tpu_custom_call.1} parent=1 // loop_header_branch
      %14 = sbr.rel (%p12) target = $region8
    $region5: #{tpu_custom_call.1} parent=1 // loop_body
      %s16 = ssub.s32 %s11, 1
      %s17 = ssub.s32 %s11, 2
      %s24 = sadd.s32 1, %s19
      %p25 = scmp.ge.s32.totalorder %s24, 1
      %s26 = scalar_select %p25, 0, %s24
      %s27 = sadd.s32 1, %s18
      %s28 = scalar_select %p25, %s27, %s18
      %p29 = scmp.ge.s32.totalorder %s28, 2
      %s30 = scalar_select %p29, 0, %s28
      %s31 = ssub.s32 %s18, %s30
      %p32 = scmp.eq.s32.totalorder %s31, 0
      %s34 = sadd.s32 %s33, 1
      %s35 = scalar_select %p32, %s33, %s34
      %p38 = pneg %p32
      %p39 = scmp.eq.s32.totalorder %s11, 1
      %p40 = por %p38, %p39
      %p41 = scmp.ne.s32.totalorder %s33, %s36
      %p42 = scmp.eq.s32.totalorder %s11, 0
      %p43 = por %p41, %p42
      %p44 = scmp.ne.s32.totalorder %s33, %s36
      %p45 = scmp.eq.s32.totalorder %s16, 1
      %p46 = por %p44, %p45
      %p47 = scmp.ne.s32.totalorder %s36, %s37
      %p48 = scmp.eq.s32.totalorder %s16, 0
      %p49 = por %p47, %p48
      %p50 = scmp.ne.s32.totalorder %s36, %s37
      %p51 = scmp.eq.s32.totalorder %s17, 1
      %p52 = por %p50, %p51
      %p54 = scmp.ne.s32.totalorder %s37, %s53
      %p55 = scmp.eq.s32.totalorder %s17, 0
      %p56 = por %p54, %p55
      %s58 = sadd.s32 %s57, 1
      %p61 = scmp.eq.s32.totalorder %s11, 1
      %p62 = scmp.ne.s32.totalorder %s57, %s59
      %p63 = scmp.eq.s32.totalorder %s11, 0
      %p64 = por %p62, %p63
      %p65 = scmp.ne.s32.totalorder %s57, %s59
      %p66 = scmp.eq.s32.totalorder %s16, 1
      %p67 = por %p65, %p66
      %p68 = scmp.ne.s32.totalorder %s59, %s60
      %p69 = scmp.eq.s32.totalorder %s16, 0
      %p70 = por %p68, %p69
      %p71 = scmp.ne.s32.totalorder %s59, %s60
      %p72 = scmp.eq.s32.totalorder %s17, 1
      %p73 = por %p71, %p72
      %p75 = scmp.ne.s32.totalorder %s60, %s74
      %p76 = scmp.eq.s32.totalorder %s17, 0
      %p77 = por %p75, %p76
      %s78 = ssub.s32 %s18, %s30
      %s79 = ssub.s32 %s19, %s26
      %s80 = sor.u32 %s78, %s79
      %p81 = scmp.eq.s32.totalorder %s80, 0
      %s83 = sadd.s32 %s82, 1
      %s84 = scalar_select %p81, %s82, %s83
      %p87 = pneg %p81
      %p88 = scmp.eq.s32.totalorder %s11, 1
      %p89 = por %p87, %p88
      %p90 = scmp.ne.s32.totalorder %s82, %s85
      %p91 = scmp.eq.s32.totalorder %s11, 0
      %p92 = por %p90, %p91
      %p93 = scmp.ne.s32.totalorder %s82, %s85
      %p94 = scmp.eq.s32.totalorder %s16, 1
      %p95 = por %p93, %p94
      %p96 = scmp.ne.s32.totalorder %s85, %s86
      %p97 = scmp.eq.s32.totalorder %s16, 0
      %p98 = por %p96, %p97
      %p99 = scmp.ne.s32.totalorder %s85, %s86
      %p100 = scmp.eq.s32.totalorder %s17, 1
      %p101 = por %p99, %p100
      %p103 = scmp.ne.s32.totalorder %s86, %s102
      %p104 = scmp.eq.s32.totalorder %s17, 0
      %p105 = por %p103, %p104
      %p106 = scmp.le.s32.totalorder 1, %s11
      %p107 = scmp.lt.s32.totalorder %s11, 3
      %p108 = pnand %p106, %p107
      %p109 = pneg %p108
      // Predicated region
      $region9: #{tpu_custom_call.1} parent=5 // pred_check
        _
      $region10: #{tpu_custom_call.1} parent=5 // pred_check_branch
        %111 = sbr.rel (%p108) target = $region12
      $region11: #{tpu_custom_call.1} parent=5 // pred_region
        %s112 = ssub.s32 %s11, 1
        // Predicated region
        $region13: #{tpu_custom_call.1} parent=11 // pred_check
          %p113 = pneg %p70
        $region14: #{tpu_custom_call.1} parent=11 // pred_check_branch
          %115 = sbr.rel (%p113) target = $region16
        $region15: #{tpu_custom_call.1} parent=11 // pred_region
          _
        $region16: #{tpu_custom_call.1} parent=11 // pred_fallthru
          _
      $region12: #{tpu_custom_call.1} parent=5 // pred_fallthru
        _
      %p116 = scmp.lt.s32.totalorder %s11, 2
      // Predicated region
      $region17: #{tpu_custom_call.1} parent=5 // pred_check
        %p117 = pneg %p116
      $region18: #{tpu_custom_call.1} parent=5 // pred_check_branch
        %119 = sbr.rel (%p117) target = $region20
      $region19: #{tpu_custom_call.1} parent=5 // pred_region
        // Predicated region
        $region21: #{tpu_custom_call.1} parent=19 // pred_check
          %p120 = pneg %p43
        $region22: #{tpu_custom_call.1} parent=19 // pred_check_branch
          %122 = sbr.rel (%p120) target = $region24
        $region23: #{tpu_custom_call.1} parent=19 // pred_region
          %p123 = scmp.lt.s32.totalorder %s18, 1
          %s124 = scalar_select %p123, %s18, 1
          %s125 = smul.addr %s124, 54
          %s126 = smul.addr %s125, 8
          %s127 = scalar_lea.vmem %s0, %s126
        $region24: #{tpu_custom_call.1} parent=19 // pred_fallthru
          _
      $region20: #{tpu_custom_call.1} parent=5 // pred_fallthru
        _
      %p128 = scmp.le.s32.totalorder 1, %s11
      %p129 = scmp.lt.s32.totalorder %s11, 3
      %p130 = pnand %p128, %p129
      %p131 = pneg %p130
      // Predicated region
      $region25: #{tpu_custom_call.1} parent=5 // pred_check
        _
      $region26: #{tpu_custom_call.1} parent=5 // pred_check_branch
        %133 = sbr.rel (%p130) target = $region28
      $region27: #{tpu_custom_call.1} parent=5 // pred_region
        %s134 = ssub.s32 %s11, 1
        %p135 = scmp.lt.s32.totalorder %s20, 1
        %s136 = scalar_select %p135, %s20, 1
        %s137 = smul.addr %s136, 54
        %s138 = smul.addr %s137, 8
        %s139 = scalar_lea.vmem %s0, %s138
        %p140 = pneg %p49
        %p141 = pneg %p46
        %p142 = pneg %p70
        %p143 = pneg %p67
        %p144 = pneg %p98
        %p145 = pneg %p95
        %s146 = sand.u32 %s85, 1
        %s147 = scalar_lea.sflag [#allocation3], %s146
        %s148 = sand.u32 %s85, 1
        %s149 = smul.addr %s148, 256
        %s150 = scalar_lea.vmem [#allocation2], %s149
        %p151 = scmp.lt.s32.totalorder %s20, 1
        %s152 = scalar_select %p151, %s20, 1
        %s153 = smul.addr %s152, 54
        %s154 = smul.addr %s153, 8
        %s155 = scalar_lea.vmem %s0, %s154
        %s156 = smul.u32 16, %s21
        %s157 = smul.u32 %s21, 16
        %s158 = smul.u32 %s157, 24
        %s159 = scalar_lea.vmem %s155, %s158
        %v160 = vld [vmem:[%s159] sm:$0xff]
        %v161 = vld [vmem:[%s159 + $0x8] sm:$0xff]
        %v162 = vld [vmem:[%s159 + $0x10] sm:$0x3]
        %v163 = vld [vmem:[%s159 + $0x18] sm:$0xff]
        %v164 = vld [vmem:[%s159 + $0x20] sm:$0xff]
        %v165 = vld [vmem:[%s159 + $0x28] sm:$0x3]
        %v166 = vld [vmem:[%s159 + $0x30] sm:$0xff]
        %v167 = vld [vmem:[%s159 + $0x38] sm:$0xff]
        %v168 = vld [vmem:[%s159 + $0x40] sm:$0x3]
        %v169 = vld [vmem:[%s159 + $0x48] sm:$0xff]
        %v170 = vld [vmem:[%s159 + $0x50] sm:$0xff]
        %v171 = vld [vmem:[%s159 + $0x58] sm:$0x3]
        %v172 = vld [vmem:[%s159 + $0x60] sm:$0xff]
        %v173 = vld [vmem:[%s159 + $0x68] sm:$0xff]
        %v174 = vld [vmem:[%s159 + $0x70] sm:$0x3]
        %v175 = vld [vmem:[%s159 + $0x78] sm:$0xff]
        %v176 = vld [vmem:[%s159 + $0x80] sm:$0xff]
        %v177 = vld [vmem:[%s159 + $0x88] sm:$0x3]
        %v178 = vld [vmem:[%s159 + $0x90] sm:$0xff]
        %v179 = vld [vmem:[%s159 + $0x98] sm:$0xff]
        %v180 = vld [vmem:[%s159 + $0xa0] sm:$0x3]
        %v181 = vld [vmem:[%s159 + $0xa8] sm:$0xff]
        %v182 = vld [vmem:[%s159 + $0xb0] sm:$0xff]
        %v183 = vld [vmem:[%s159 + $0xb8] sm:$0x3]
        %v184 = vld [vmem:[%s159 + $0xc0] sm:$0xff]
        %v185 = vld [vmem:[%s159 + $0xc8] sm:$0xff]
        %v186 = vld [vmem:[%s159 + $0xd0] sm:$0x3]
        %v187 = vld [vmem:[%s159 + $0xd8] sm:$0xff]
        %v188 = vld [vmem:[%s159 + $0xe0] sm:$0xff]
        %v189 = vld [vmem:[%s159 + $0xe8] sm:$0x3]
        %v190 = vld [vmem:[%s159 + $0xf0] sm:$0xff]
        %v191 = vld [vmem:[%s159 + $0xf8] sm:$0xff]
        %v192 = vld [vmem:[%s159 + $0x100] sm:$0x3]
        %v193 = vld [vmem:[%s159 + $0x108] sm:$0xff]
        %v194 = vld [vmem:[%s159 + $0x110] sm:$0xff]
        %v195 = vld [vmem:[%s159 + $0x118] sm:$0x3]
        %v196 = vld [vmem:[%s159 + $0x120] sm:$0xff]
        %v197 = vld [vmem:[%s159 + $0x128] sm:$0xff]
        %v198 = vld [vmem:[%s159 + $0x130] sm:$0x3]
        %v199 = vld [vmem:[%s159 + $0x138] sm:$0xff]
        %v200 = vld [vmem:[%s159 + $0x140] sm:$0xff]
        %v201 = vld [vmem:[%s159 + $0x148] sm:$0x3]
        %v202 = vld [vmem:[%s159 + $0x150] sm:$0xff]
        %v203 = vld [vmem:[%s159 + $0x158] sm:$0xff]
        %v204 = vld [vmem:[%s159 + $0x160] sm:$0x3]
        %v205 = vld [vmem:[%s159 + $0x168] sm:$0xff]
        %v206 = vld [vmem:[%s159 + $0x170] sm:$0xff]
        %v207 = vld [vmem:[%s159 + $0x178] sm:$0x3]
        %v208 = vld [vmem:[%s159 + $0x180] sm:$0xff]
        %v209 = vld [vmem:[%s159 + $0x188] sm:$0xff]
        %v210 = vld [vmem:[%s159 + $0x190] sm:$0x3]
        %v211 = vld [vmem:[%s159 + $0x198] sm:$0xff]
        %v212 = vld [vmem:[%s159 + $0x1a0] sm:$0xff]
        %v213 = vld [vmem:[%s159 + $0x1a8] sm:$0x3]
        %vm262 = vcmask 1046528
        %v263 = vrot.slane %v160, 1
        %v264 = vrot.slane %v161, 1
        %v265 = vsel %vm262, %v263, %v264
        %v266 = vrot.slane %v162, 1
        %v267 = vsel %vm262, %v264, %v266
        %v268 = vrot.slane %v163, 1
        %v269 = vrot.slane %v164, 1
        %v270 = vsel %vm262, %v268, %v269
        %v271 = vrot.slane %v165, 1
        %v272 = vsel %vm262, %v269, %v271
        %v273 = vrot.slane %v166, 1
        %v274 = vrot.slane %v167, 1
        %v275 = vsel %vm262, %v273, %v274
        %v276 = vrot.slane %v168, 1
        %v277 = vsel %vm262, %v274, %v276
        %v278 = vrot.slane %v169, 1
        %v279 = vrot.slane %v170, 1
        %v280 = vsel %vm262, %v278, %v279
        %v281 = vrot.slane %v171, 1
        %v282 = vsel %vm262, %v279, %v281
        %v283 = vrot.slane %v172, 1
        %v284 = vrot.slane %v173, 1
        %v285 = vsel %vm262, %v283, %v284
        %v286 = vrot.slane %v174, 1
        %v287 = vsel %vm262, %v284, %v286
        %v288 = vrot.slane %v175, 1
        %v289 = vrot.slane %v176, 1
        %v290 = vsel %vm262, %v288, %v289
        %v291 = vrot.slane %v177, 1
        %v292 = vsel %vm262, %v289, %v291
        %v293 = vrot.slane %v178, 1
        %v294 = vrot.slane %v179, 1
        %v295 = vsel %vm262, %v293, %v294
        %v296 = vrot.slane %v180, 1
        %v297 = vsel %vm262, %v294, %v296
        %v298 = vrot.slane %v181, 1
        %v299 = vrot.slane %v182, 1
        %v300 = vsel %vm262, %v298, %v299
        %v301 = vrot.slane %v183, 1
        %v302 = vsel %vm262, %v299, %v301
        %v303 = vrot.slane %v184, 1
        %v304 = vrot.slane %v185, 1
        %v305 = vsel %vm262, %v303, %v304
        %v306 = vrot.slane %v186, 1
        %v307 = vsel %vm262, %v304, %v306
        %v308 = vrot.slane %v187, 1
        %v309 = vrot.slane %v188, 1
        %v310 = vsel %vm262, %v308, %v309
        %v311 = vrot.slane %v189, 1
        %v312 = vsel %vm262, %v309, %v311
        %v313 = vrot.slane %v190, 1
        %v314 = vrot.slane %v191, 1
        %v315 = vsel %vm262, %v313, %v314
        %v316 = vrot.slane %v192, 1
        %v317 = vsel %vm262, %v314, %v316
        %v318 = vrot.slane %v193, 1
        %v319 = vrot.slane %v194, 1
        %v320 = vsel %vm262, %v318, %v319
        %v321 = vrot.slane %v195, 1
        %v322 = vsel %vm262, %v319, %v321
        %v323 = vrot.slane %v196, 1
        %v324 = vrot.slane %v197, 1
        %v325 = vsel %vm262, %v323, %v324
        %v326 = vrot.slane %v198, 1
        %v327 = vsel %vm262, %v324, %v326
        %v328 = vrot.slane %v199, 1
        %v329 = vrot.slane %v200, 1
        %v330 = vsel %vm262, %v328, %v329
        %v331 = vrot.slane %v201, 1
        %v332 = vsel %vm262, %v329, %v331
        %v333 = vrot.slane %v202, 1
        %v334 = vrot.slane %v203, 1
        %v335 = vsel %vm262, %v333, %v334
        %v336 = vrot.slane %v204, 1
        %v337 = vsel %vm262, %v334, %v336
        %v338 = vrot.slane %v205, 1
        %v339 = vrot.slane %v206, 1
        %v340 = vsel %vm262, %v338, %v339
        %v341 = vrot.slane %v207, 1
        %v342 = vsel %vm262, %v339, %v341
        %343 = vrot.lane.b32.xlu0 %v265, 4
        %v344 = vpop.permute.xlu0 %343
        %345 = vrot.lane.b32.xlu0 %v267, 4
        %v346 = vpop.permute.xlu0 %345
        %347 = vrot.lane.b32.xlu0 %v270, 4
        %v348 = vpop.permute.xlu0 %347
        %349 = vrot.lane.b32.xlu0 %v272, 4
        %v350 = vpop.permute.xlu0 %349
        %351 = vrot.lane.b32.xlu0 %v275, 4
        %v352 = vpop.permute.xlu0 %351
        %353 = vrot.lane.b32.xlu0 %v277, 4
        %v354 = vpop.permute.xlu0 %353
        %355 = vrot.lane.b32.xlu0 %v280, 4
        %v356 = vpop.permute.xlu0 %355
        %357 = vrot.lane.b32.xlu0 %v282, 4
        %v358 = vpop.permute.xlu0 %357
        %359 = vrot.lane.b32.xlu0 %v285, 4
        %v360 = vpop.permute.xlu0 %359
        %361 = vrot.lane.b32.xlu0 %v287, 4
        %v362 = vpop.permute.xlu0 %361
        %363 = vrot.lane.b32.xlu0 %v290, 4
        %v364 = vpop.permute.xlu0 %363
        %365 = vrot.lane.b32.xlu0 %v292, 4
        %v366 = vpop.permute.xlu0 %365
        %367 = vrot.lane.b32.xlu0 %v295, 4
        %v368 = vpop.permute.xlu0 %367
        %369 = vrot.lane.b32.xlu0 %v297, 4
        %v370 = vpop.permute.xlu0 %369
        %371 = vrot.lane.b32.xlu0 %v300, 4
        %v372 = vpop.permute.xlu0 %371
        %373 = vrot.lane.b32.xlu0 %v302, 4
        %v374 = vpop.permute.xlu0 %373
        %375 = vrot.lane.b32.xlu0 %v305, 4
        %v376 = vpop.permute.xlu0 %375
        %377 = vrot.lane.b32.xlu0 %v307, 4
        %v378 = vpop.permute.xlu0 %377
        %379 = vrot.lane.b32.xlu0 %v310, 4
        %v380 = vpop.permute.xlu0 %379
        %381 = vrot.lane.b32.xlu0 %v312, 4
        %v382 = vpop.permute.xlu0 %381
        %383 = vrot.lane.b32.xlu0 %v315, 4
        %v384 = vpop.permute.xlu0 %383
        %385 = vrot.lane.b32.xlu0 %v317, 4
        %v386 = vpop.permute.xlu0 %385
        %387 = vrot.lane.b32.xlu0 %v320, 4
        %v388 = vpop.permute.xlu0 %387
        %389 = vrot.lane.b32.xlu0 %v322, 4
        %v390 = vpop.permute.xlu0 %389
        %391 = vrot.lane.b32.xlu0 %v325, 4
        %v392 = vpop.permute.xlu0 %391
        %393 = vrot.lane.b32.xlu0 %v327, 4
        %v394 = vpop.permute.xlu0 %393
        %395 = vrot.lane.b32.xlu0 %v330, 4
        %v396 = vpop.permute.xlu0 %395
        %397 = vrot.lane.b32.xlu0 %v332, 4
        %v398 = vpop.permute.xlu0 %397
        %399 = vrot.lane.b32.xlu0 %v335, 4
        %v400 = vpop.permute.xlu0 %399
        %401 = vrot.lane.b32.xlu0 %v337, 4
        %v402 = vpop.permute.xlu0 %401
        %403 = vrot.lane.b32.xlu0 %v340, 4
        %v404 = vpop.permute.xlu0 %403
        %405 = vrot.lane.b32.xlu0 %v342, 4
        %v406 = vpop.permute.xlu0 %405
        %vm439 = vcmask 1045504
        %v440 = vrot.slane %v160, 2
        %v441 = vrot.slane %v161, 2
        %v442 = vsel %vm439, %v440, %v441
        %v443 = vrot.slane %v162, 2
        %v444 = vsel %vm439, %v441, %v443
        %v445 = vrot.slane %v163, 2
        %v446 = vrot.slane %v164, 2
        %v447 = vsel %vm439, %v445, %v446
        %v448 = vrot.slane %v165, 2
        %v449 = vsel %vm439, %v446, %v448
        %v450 = vrot.slane %v166, 2
        %v451 = vrot.slane %v167, 2
        %v452 = vsel %vm439, %v450, %v451
        %v453 = vrot.slane %v168, 2
        %v454 = vsel %vm439, %v451, %v453
        %v455 = vrot.slane %v169, 2
        %v456 = vrot.slane %v170, 2
        %v457 = vsel %vm439, %v455, %v456
        %v458 = vrot.slane %v171, 2
        %v459 = vsel %vm439, %v456, %v458
        %v460 = vrot.slane %v172, 2
        %v461 = vrot.slane %v173, 2
        %v462 = vsel %vm439, %v460, %v461
        %v463 = vrot.slane %v174, 2
        %v464 = vsel %vm439, %v461, %v463
        %v465 = vrot.slane %v175, 2
        %v466 = vrot.slane %v176, 2
        %v467 = vsel %vm439, %v465, %v466
        %v468 = vrot.slane %v177, 2
        %v469 = vsel %vm439, %v466, %v468
        %v470 = vrot.slane %v178, 2
        %v471 = vrot.slane %v179, 2
        %v472 = vsel %vm439, %v470, %v471
        %v473 = vrot.slane %v180, 2
        %v474 = vsel %vm439, %v471, %v473
        %v475 = vrot.slane %v181, 2
        %v476 = vrot.slane %v182, 2
        %v477 = vsel %vm439, %v475, %v476
        %v478 = vrot.slane %v183, 2
        %v479 = vsel %vm439, %v476, %v478
        %v480 = vrot.slane %v184, 2
        %v481 = vrot.slane %v185, 2
        %v482 = vsel %vm439, %v480, %v481
        %v483 = vrot.slane %v186, 2
        %v484 = vsel %vm439, %v481, %v483
        %v485 = vrot.slane %v187, 2
        %v486 = vrot.slane %v188, 2
        %v487 = vsel %vm439, %v485, %v486
        %v488 = vrot.slane %v189, 2
        %v489 = vsel %vm439, %v486, %v488
        %v490 = vrot.slane %v190, 2
        %v491 = vrot.slane %v191, 2
        %v492 = vsel %vm439, %v490, %v491
        %v493 = vrot.slane %v192, 2
        %v494 = vsel %vm439, %v491, %v493
        %v495 = vrot.slane %v193, 2
        %v496 = vrot.slane %v194, 2
        %v497 = vsel %vm439, %v495, %v496
        %v498 = vrot.slane %v195, 2
        %v499 = vsel %vm439, %v496, %v498
        %v500 = vrot.slane %v196, 2
        %v501 = vrot.slane %v197, 2
        %v502 = vsel %vm439, %v500, %v501
        %v503 = vrot.slane %v198, 2
        %v504 = vsel %vm439, %v501, %v503
        %v505 = vrot.slane %v199, 2
        %v506 = vrot.slane %v200, 2
        %v507 = vsel %vm439, %v505, %v506
        %v508 = vrot.slane %v201, 2
        %v509 = vsel %vm439, %v506, %v508
        %v510 = vrot.slane %v202, 2
        %v511 = vrot.slane %v203, 2
        %v512 = vsel %vm439, %v510, %v511
        %v513 = vrot.slane %v204, 2
        %v514 = vsel %vm439, %v511, %v513
        %v515 = vrot.slane %v205, 2
        %v516 = vrot.slane %v206, 2
        %v517 = vsel %vm439, %v515, %v516
        %v518 = vrot.slane %v207, 2
        %v519 = vsel %vm439, %v516, %v518
        %520 = vrot.lane.b32.xlu0 %v442, 8
        %v521 = vpop.permute.xlu0 %520
        %522 = vrot.lane.b32.xlu0 %v444, 8
        %v523 = vpop.permute.xlu0 %522
        %524 = vrot.lane.b32.xlu0 %v447, 8
        %v525 = vpop.permute.xlu0 %524
        %526 = vrot.lane.b32.xlu0 %v449, 8
        %v527 = vpop.permute.xlu0 %526
        %528 = vrot.lane.b32.xlu0 %v452, 8
        %v529 = vpop.permute.xlu0 %528
        %530 = vrot.lane.b32.xlu0 %v454, 8
        %v531 = vpop.permute.xlu0 %530
        %532 = vrot.lane.b32.xlu0 %v457, 8
        %v533 = vpop.permute.xlu0 %532
        %534 = vrot.lane.b32.xlu0 %v459, 8
        %v535 = vpop.permute.xlu0 %534
        %536 = vrot.lane.b32.xlu0 %v462, 8
        %v537 = vpop.permute.xlu0 %536
        %538 = vrot.lane.b32.xlu0 %v464, 8
        %v539 = vpop.permute.xlu0 %538
        %540 = vrot.lane.b32.xlu0 %v467, 8
        %v541 = vpop.permute.xlu0 %540
        %542 = vrot.lane.b32.xlu0 %v469, 8
        %v543 = vpop.permute.xlu0 %542
        %544 = vrot.lane.b32.xlu0 %v472, 8
        %v545 = vpop.permute.xlu0 %544
        %546 = vrot.lane.b32.xlu0 %v474, 8
        %v547 = vpop.permute.xlu0 %546
        %548 = vrot.lane.b32.xlu0 %v477, 8
        %v549 = vpop.permute.xlu0 %548
        %550 = vrot.lane.b32.xlu0 %v479, 8
        %v551 = vpop.permute.xlu0 %550
        %552 = vrot.lane.b32.xlu0 %v482, 8
        %v553 = vpop.permute.xlu0 %552
        %554 = vrot.lane.b32.xlu0 %v484, 8
        %v555 = vpop.permute.xlu0 %554
        %556 = vrot.lane.b32.xlu0 %v487, 8
        %v557 = vpop.permute.xlu0 %556
        %558 = vrot.lane.b32.xlu0 %v489, 8
        %v559 = vpop.permute.xlu0 %558
        %560 = vrot.lane.b32.xlu0 %v492, 8
        %v561 = vpop.permute.xlu0 %560
        %562 = vrot.lane.b32.xlu0 %v494, 8
        %v563 = vpop.permute.xlu0 %562
        %564 = vrot.lane.b32.xlu0 %v497, 8
        %v565 = vpop.permute.xlu0 %564
        %566 = vrot.lane.b32.xlu0 %v499, 8
        %v567 = vpop.permute.xlu0 %566
        %568 = vrot.lane.b32.xlu0 %v502, 8
        %v569 = vpop.permute.xlu0 %568
        %570 = vrot.lane.b32.xlu0 %v504, 8
        %v571 = vpop.permute.xlu0 %570
        %572 = vrot.lane.b32.xlu0 %v507, 8
        %v573 = vpop.permute.xlu0 %572
        %574 = vrot.lane.b32.xlu0 %v509, 8
        %v575 = vpop.permute.xlu0 %574
        %576 = vrot.lane.b32.xlu0 %v512, 8
        %v577 = vpop.permute.xlu0 %576
        %578 = vrot.lane.b32.xlu0 %v514, 8
        %v579 = vpop.permute.xlu0 %578
        %580 = vrot.lane.b32.xlu0 %v517, 8
        %v581 = vpop.permute.xlu0 %580
        %582 = vrot.lane.b32.xlu0 %v519, 8
        %v583 = vpop.permute.xlu0 %582
        %618 = vrot.lane.b32.xlu0 %v163, 12
        %v619 = vpop.permute.xlu0 %618
        %620 = vrot.lane.b32.xlu0 %v164, 12
        %v621 = vpop.permute.xlu0 %620
        %622 = vrot.lane.b32.xlu0 %v166, 12
        %v623 = vpop.permute.xlu0 %622
        %624 = vrot.lane.b32.xlu0 %v167, 12
        %v625 = vpop.permute.xlu0 %624
        %626 = vrot.lane.b32.xlu0 %v169, 12
        %v627 = vpop.permute.xlu0 %626
        %628 = vrot.lane.b32.xlu0 %v170, 12
        %v629 = vpop.permute.xlu0 %628
        %630 = vrot.lane.b32.xlu0 %v172, 12
        %v631 = vpop.permute.xlu0 %630
        %632 = vrot.lane.b32.xlu0 %v173, 12
        %v633 = vpop.permute.xlu0 %632
        %634 = vrot.lane.b32.xlu0 %v175, 12
        %v635 = vpop.permute.xlu0 %634
        %636 = vrot.lane.b32.xlu0 %v176, 12
        %v637 = vpop.permute.xlu0 %636
        %638 = vrot.lane.b32.xlu0 %v178, 12
        %v639 = vpop.permute.xlu0 %638
        %640 = vrot.lane.b32.xlu0 %v179, 12
        %v641 = vpop.permute.xlu0 %640
        %642 = vrot.lane.b32.xlu0 %v181, 12
        %v643 = vpop.permute.xlu0 %642
        %644 = vrot.lane.b32.xlu0 %v182, 12
        %v645 = vpop.permute.xlu0 %644
        %646 = vrot.lane.b32.xlu0 %v184, 12
        %v647 = vpop.permute.xlu0 %646
        %648 = vrot.lane.b32.xlu0 %v185, 12
        %v649 = vpop.permute.xlu0 %648
        %650 = vrot.lane.b32.xlu0 %v187, 12
        %v651 = vpop.permute.xlu0 %650
        %652 = vrot.lane.b32.xlu0 %v188, 12
        %v653 = vpop.permute.xlu0 %652
        %654 = vrot.lane.b32.xlu0 %v190, 12
        %v655 = vpop.permute.xlu0 %654
        %656 = vrot.lane.b32.xlu0 %v191, 12
        %v657 = vpop.permute.xlu0 %656
        %658 = vrot.lane.b32.xlu0 %v193, 12
        %v659 = vpop.permute.xlu0 %658
        %660 = vrot.lane.b32.xlu0 %v194, 12
        %v661 = vpop.permute.xlu0 %660
        %662 = vrot.lane.b32.xlu0 %v196, 12
        %v663 = vpop.permute.xlu0 %662
        %664 = vrot.lane.b32.xlu0 %v197, 12
        %v665 = vpop.permute.xlu0 %664
        %666 = vrot.lane.b32.xlu0 %v199, 12
        %v667 = vpop.permute.xlu0 %666
        %668 = vrot.lane.b32.xlu0 %v200, 12
        %v669 = vpop.permute.xlu0 %668
        %670 = vrot.lane.b32.xlu0 %v202, 12
        %v671 = vpop.permute.xlu0 %670
        %672 = vrot.lane.b32.xlu0 %v203, 12
        %v673 = vpop.permute.xlu0 %672
        %674 = vrot.lane.b32.xlu0 %v205, 12
        %v675 = vpop.permute.xlu0 %674
        %676 = vrot.lane.b32.xlu0 %v206, 12
        %v677 = vpop.permute.xlu0 %676
        %678 = vrot.lane.b32.xlu0 %v208, 12
        %v679 = vpop.permute.xlu0 %678
        %680 = vrot.lane.b32.xlu0 %v209, 12
        %v681 = vpop.permute.xlu0 %680
        %v715 = vrot.slane %v208, 1
        %v716 = vrot.slane %v209, 1
        %v717 = vsel %vm262, %v715, %v716
        %v718 = vrot.slane %v210, 1
        %v719 = vsel %vm262, %v716, %v718
        %720 = vrot.lane.b32.xlu0 %v270, 16
        %v721 = vpop.permute.xlu0 %720
        %722 = vrot.lane.b32.xlu0 %v272, 16
        %v723 = vpop.permute.xlu0 %722
        %724 = vrot.lane.b32.xlu0 %v275, 16
        %v725 = vpop.permute.xlu0 %724
        %726 = vrot.lane.b32.xlu0 %v277, 16
        %v727 = vpop.permute.xlu0 %726
        %728 = vrot.lane.b32.xlu0 %v280, 16
        %v729 = vpop.permute.xlu0 %728
        %730 = vrot.lane.b32.xlu0 %v282, 16
        %v731 = vpop.permute.xlu0 %730
        %732 = vrot.lane.b32.xlu0 %v285, 16
        %v733 = vpop.permute.xlu0 %732
        %734 = vrot.lane.b32.xlu0 %v287, 16
        %v735 = vpop.permute.xlu0 %734
        %736 = vrot.lane.b32.xlu0 %v290, 16
        %v737 = vpop.permute.xlu0 %736
        %738 = vrot.lane.b32.xlu0 %v292, 16
        %v739 = vpop.permute.xlu0 %738
        %740 = vrot.lane.b32.xlu0 %v295, 16
        %v741 = vpop.permute.xlu0 %740
        %742 = vrot.lane.b32.xlu0 %v297, 16
        %v743 = vpop.permute.xlu0 %742
        %744 = vrot.lane.b32.xlu0 %v300, 16
        %v745 = vpop.permute.xlu0 %744
        %746 = vrot.lane.b32.xlu0 %v302, 16
        %v747 = vpop.permute.xlu0 %746
        %748 = vrot.lane.b32.xlu0 %v305, 16
        %v749 = vpop.permute.xlu0 %748
        %750 = vrot.lane.b32.xlu0 %v307, 16
        %v751 = vpop.permute.xlu0 %750
        %752 = vrot.lane.b32.xlu0 %v310, 16
        %v753 = vpop.permute.xlu0 %752
        %754 = vrot.lane.b32.xlu0 %v312, 16
        %v755 = vpop.permute.xlu0 %754
        %756 = vrot.lane.b32.xlu0 %v315, 16
        %v757 = vpop.permute.xlu0 %756
        %758 = vrot.lane.b32.xlu0 %v317, 16
        %v759 = vpop.permute.xlu0 %758
        %760 = vrot.lane.b32.xlu0 %v320, 16
        %v761 = vpop.permute.xlu0 %760
        %762 = vrot.lane.b32.xlu0 %v322, 16
        %v763 = vpop.permute.xlu0 %762
        %764 = vrot.lane.b32.xlu0 %v325, 16
        %v765 = vpop.permute.xlu0 %764
        %766 = vrot.lane.b32.xlu0 %v327, 16
        %v767 = vpop.permute.xlu0 %766
        %768 = vrot.lane.b32.xlu0 %v330, 16
        %v769 = vpop.permute.xlu0 %768
        %770 = vrot.lane.b32.xlu0 %v332, 16
        %v771 = vpop.permute.xlu0 %770
        %772 = vrot.lane.b32.xlu0 %v335, 16
        %v773 = vpop.permute.xlu0 %772
        %774 = vrot.lane.b32.xlu0 %v337, 16
        %v775 = vpop.permute.xlu0 %774
        %776 = vrot.lane.b32.xlu0 %v340, 16
        %v777 = vpop.permute.xlu0 %776
        %778 = vrot.lane.b32.xlu0 %v342, 16
        %v779 = vpop.permute.xlu0 %778
        %780 = vrot.lane.b32.xlu0 %v717, 16
        %v781 = vpop.permute.xlu0 %780
        %782 = vrot.lane.b32.xlu0 %v719, 16
        %v783 = vpop.permute.xlu0 %782
        %v816 = vrot.slane %v208, 2
        %v817 = vrot.slane %v209, 2
        %v818 = vsel %vm439, %v816, %v817
        %v819 = vrot.slane %v210, 2
        %v820 = vsel %vm439, %v817, %v819
        %821 = vrot.lane.b32.xlu0 %v447, 20
        %v822 = vpop.permute.xlu0 %821
        %823 = vrot.lane.b32.xlu0 %v449, 20
        %v824 = vpop.permute.xlu0 %823
        %825 = vrot.lane.b32.xlu0 %v452, 20
        %v826 = vpop.permute.xlu0 %825
        %827 = vrot.lane.b32.xlu0 %v454, 20
        %v828 = vpop.permute.xlu0 %827
        %829 = vrot.lane.b32.xlu0 %v457, 20
        %v830 = vpop.permute.xlu0 %829
        %831 = vrot.lane.b32.xlu0 %v459, 20
        %v832 = vpop.permute.xlu0 %831
        %833 = vrot.lane.b32.xlu0 %v462, 20
        %v834 = vpop.permute.xlu0 %833
        %835 = vrot.lane.b32.xlu0 %v464, 20
        %v836 = vpop.permute.xlu0 %835
        %837 = vrot.lane.b32.xlu0 %v467, 20
        %v838 = vpop.permute.xlu0 %837
        %839 = vrot.lane.b32.xlu0 %v469, 20
        %v840 = vpop.permute.xlu0 %839
        %841 = vrot.lane.b32.xlu0 %v472, 20
        %v842 = vpop.permute.xlu0 %841
        %843 = vrot.lane.b32.xlu0 %v474, 20
        %v844 = vpop.permute.xlu0 %843
        %845 = vrot.lane.b32.xlu0 %v477, 20
        %v846 = vpop.permute.xlu0 %845
        %847 = vrot.lane.b32.xlu0 %v479, 20
        %v848 = vpop.permute.xlu0 %847
        %849 = vrot.lane.b32.xlu0 %v482, 20
        %v850 = vpop.permute.xlu0 %849
        %851 = vrot.lane.b32.xlu0 %v484, 20
        %v852 = vpop.permute.xlu0 %851
        %853 = vrot.lane.b32.xlu0 %v487, 20
        %v854 = vpop.permute.xlu0 %853
        %855 = vrot.lane.b32.xlu0 %v489, 20
        %v856 = vpop.permute.xlu0 %855
        %857 = vrot.lane.b32.xlu0 %v492, 20
        %v858 = vpop.permute.xlu0 %857
        %859 = vrot.lane.b32.xlu0 %v494, 20
        %v860 = vpop.permute.xlu0 %859
        %861 = vrot.lane.b32.xlu0 %v497, 20
        %v862 = vpop.permute.xlu0 %861
        %863 = vrot.lane.b32.xlu0 %v499, 20
        %v864 = vpop.permute.xlu0 %863
        %865 = vrot.lane.b32.xlu0 %v502, 20
        %v866 = vpop.permute.xlu0 %865
        %867 = vrot.lane.b32.xlu0 %v504, 20
        %v868 = vpop.permute.xlu0 %867
        %869 = vrot.lane.b32.xlu0 %v507, 20
        %v870 = vpop.permute.xlu0 %869
        %871 = vrot.lane.b32.xlu0 %v509, 20
        %v872 = vpop.permute.xlu0 %871
        %873 = vrot.lane.b32.xlu0 %v512, 20
        %v874 = vpop.permute.xlu0 %873
        %875 = vrot.lane.b32.xlu0 %v514, 20
        %v876 = vpop.permute.xlu0 %875
        %877 = vrot.lane.b32.xlu0 %v517, 20
        %v878 = vpop.permute.xlu0 %877
        %879 = vrot.lane.b32.xlu0 %v519, 20
        %v880 = vpop.permute.xlu0 %879
        %881 = vrot.lane.b32.xlu0 %v818, 20
        %v882 = vpop.permute.xlu0 %881
        %883 = vrot.lane.b32.xlu0 %v820, 20
        %v884 = vpop.permute.xlu0 %883
        %919 = vrot.lane.b32.xlu0 %v166, 24
        %v920 = vpop.permute.xlu0 %919
        %921 = vrot.lane.b32.xlu0 %v167, 24
        %v922 = vpop.permute.xlu0 %921
        %923 = vrot.lane.b32.xlu0 %v169, 24
        %v924 = vpop.permute.xlu0 %923
        %925 = vrot.lane.b32.xlu0 %v170, 24
        %v926 = vpop.permute.xlu0 %925
        %927 = vrot.lane.b32.xlu0 %v172, 24
        %v928 = vpop.permute.xlu0 %927
        %929 = vrot.lane.b32.xlu0 %v173, 24
        %v930 = vpop.permute.xlu0 %929
        %931 = vrot.lane.b32.xlu0 %v175, 24
        %v932 = vpop.permute.xlu0 %931
        %933 = vrot.lane.b32.xlu0 %v176, 24
        %v934 = vpop.permute.xlu0 %933
        %935 = vrot.lane.b32.xlu0 %v178, 24
        %v936 = vpop.permute.xlu0 %935
        %937 = vrot.lane.b32.xlu0 %v179, 24
        %v938 = vpop.permute.xlu0 %937
        %939 = vrot.lane.b32.xlu0 %v181, 24
        %v940 = vpop.permute.xlu0 %939
        %941 = vrot.lane.b32.xlu0 %v182, 24
        %v942 = vpop.permute.xlu0 %941
        %943 = vrot.lane.b32.xlu0 %v184, 24
        %v944 = vpop.permute.xlu0 %943
        %945 = vrot.lane.b32.xlu0 %v185, 24
        %v946 = vpop.permute.xlu0 %945
        %947 = vrot.lane.b32.xlu0 %v187, 24
        %v948 = vpop.permute.xlu0 %947
        %949 = vrot.lane.b32.xlu0 %v188, 24
        %v950 = vpop.permute.xlu0 %949
        %951 = vrot.lane.b32.xlu0 %v190, 24
        %v952 = vpop.permute.xlu0 %951
        %953 = vrot.lane.b32.xlu0 %v191, 24
        %v954 = vpop.permute.xlu0 %953
        %955 = vrot.lane.b32.xlu0 %v193, 24
        %v956 = vpop.permute.xlu0 %955
        %957 = vrot.lane.b32.xlu0 %v194, 24
        %v958 = vpop.permute.xlu0 %957
        %959 = vrot.lane.b32.xlu0 %v196, 24
        %v960 = vpop.permute.xlu0 %959
        %961 = vrot.lane.b32.xlu0 %v197, 24
        %v962 = vpop.permute.xlu0 %961
        %963 = vrot.lane.b32.xlu0 %v199, 24
        %v964 = vpop.permute.xlu0 %963
        %965 = vrot.lane.b32.xlu0 %v200, 24
        %v966 = vpop.permute.xlu0 %965
        %967 = vrot.lane.b32.xlu0 %v202, 24
        %v968 = vpop.permute.xlu0 %967
        %969 = vrot.lane.b32.xlu0 %v203, 24
        %v970 = vpop.permute.xlu0 %969
        %971 = vrot.lane.b32.xlu0 %v205, 24
        %v972 = vpop.permute.xlu0 %971
        %973 = vrot.lane.b32.xlu0 %v206, 24
        %v974 = vpop.permute.xlu0 %973
        %975 = vrot.lane.b32.xlu0 %v208, 24
        %v976 = vpop.permute.xlu0 %975
        %977 = vrot.lane.b32.xlu0 %v209, 24
        %v978 = vpop.permute.xlu0 %977
        %979 = vrot.lane.b32.xlu0 %v211, 24
        %v980 = vpop.permute.xlu0 %979
        %981 = vrot.lane.b32.xlu0 %v212, 24
        %v982 = vpop.permute.xlu0 %981
        %v1016 = vrot.slane %v211, 1
        %v1017 = vrot.slane %v212, 1
        %v1018 = vsel %vm262, %v1016, %v1017
        %v1019 = vrot.slane %v213, 1
        %v1020 = vsel %vm262, %v1017, %v1019
        %1021 = vrot.lane.b32.xlu0 %v275, 28
        %v1022 = vpop.permute.xlu0 %1021
        %1023 = vrot.lane.b32.xlu0 %v277, 28
        %v1024 = vpop.permute.xlu0 %1023
        %1025 = vrot.lane.b32.xlu0 %v280, 28
        %v1026 = vpop.permute.xlu0 %1025
        %1027 = vrot.lane.b32.xlu0 %v282, 28
        %v1028 = vpop.permute.xlu0 %1027
        %1029 = vrot.lane.b32.xlu0 %v285, 28
        %v1030 = vpop.permute.xlu0 %1029
        %1031 = vrot.lane.b32.xlu0 %v287, 28
        %v1032 = vpop.permute.xlu0 %1031
        %1033 = vrot.lane.b32.xlu0 %v290, 28
        %v1034 = vpop.permute.xlu0 %1033
        %1035 = vrot.lane.b32.xlu0 %v292, 28
        %v1036 = vpop.permute.xlu0 %1035
        %1037 = vrot.lane.b32.xlu0 %v295, 28
        %v1038 = vpop.permute.xlu0 %1037
        %1039 = vrot.lane.b32.xlu0 %v297, 28
        %v1040 = vpop.permute.xlu0 %1039
        %1041 = vrot.lane.b32.xlu0 %v300, 28
        %v1042 = vpop.permute.xlu0 %1041
        %1043 = vrot.lane.b32.xlu0 %v302, 28
        %v1044 = vpop.permute.xlu0 %1043
        %1045 = vrot.lane.b32.xlu0 %v305, 28
        %v1046 = vpop.permute.xlu0 %1045
        %1047 = vrot.lane.b32.xlu0 %v307, 28
        %v1048 = vpop.permute.xlu0 %1047
        %1049 = vrot.lane.b32.xlu0 %v310, 28
        %v1050 = vpop.permute.xlu0 %1049
        %1051 = vrot.lane.b32.xlu0 %v312, 28
        %v1052 = vpop.permute.xlu0 %1051
        %1053 = vrot.lane.b32.xlu0 %v315, 28
        %v1054 = vpop.permute.xlu0 %1053
        %1055 = vrot.lane.b32.xlu0 %v317, 28
        %v1056 = vpop.permute.xlu0 %1055
        %1057 = vrot.lane.b32.xlu0 %v320, 28
        %v1058 = vpop.permute.xlu0 %1057
        %1059 = vrot.lane.b32.xlu0 %v322, 28
        %v1060 = vpop.permute.xlu0 %1059
        %1061 = vrot.lane.b32.xlu0 %v325, 28
        %v1062 = vpop.permute.xlu0 %1061
        %1063 = vrot.lane.b32.xlu0 %v327, 28
        %v1064 = vpop.permute.xlu0 %1063
        %1065 = vrot.lane.b32.xlu0 %v330, 28
        %v1066 = vpop.permute.xlu0 %1065
        %1067 = vrot.lane.b32.xlu0 %v332, 28
        %v1068 = vpop.permute.xlu0 %1067
        %1069 = vrot.lane.b32.xlu0 %v335, 28
        %v1070 = vpop.permute.xlu0 %1069
        %1071 = vrot.lane.b32.xlu0 %v337, 28
        %v1072 = vpop.permute.xlu0 %1071
        %1073 = vrot.lane.b32.xlu0 %v340, 28
        %v1074 = vpop.permute.xlu0 %1073
        %1075 = vrot.lane.b32.xlu0 %v342, 28
        %v1076 = vpop.permute.xlu0 %1075
        %1077 = vrot.lane.b32.xlu0 %v717, 28
        %v1078 = vpop.permute.xlu0 %1077
        %1079 = vrot.lane.b32.xlu0 %v719, 28
        %v1080 = vpop.permute.xlu0 %1079
        %1081 = vrot.lane.b32.xlu0 %v1018, 28
        %v1082 = vpop.permute.xlu0 %1081
        %1083 = vrot.lane.b32.xlu0 %v1020, 28
        %v1084 = vpop.permute.xlu0 %1083
        %v1117 = vrot.slane %v211, 2
        %v1118 = vrot.slane %v212, 2
        %v1119 = vsel %vm439, %v1117, %v1118
        %v1120 = vrot.slane %v213, 2
        %v1121 = vsel %vm439, %v1118, %v1120
        %1122 = vrot.lane.b32.xlu0 %v452, 32
        %v1123 = vpop.permute.xlu0 %1122
        %1124 = vrot.lane.b32.xlu0 %v454, 32
        %v1125 = vpop.permute.xlu0 %1124
        %1126 = vrot.lane.b32.xlu0 %v457, 32
        %v1127 = vpop.permute.xlu0 %1126
        %1128 = vrot.lane.b32.xlu0 %v459, 32
        %v1129 = vpop.permute.xlu0 %1128
        %1130 = vrot.lane.b32.xlu0 %v462, 32
        %v1131 = vpop.permute.xlu0 %1130
        %1132 = vrot.lane.b32.xlu0 %v464, 32
        %v1133 = vpop.permute.xlu0 %1132
        %1134 = vrot.lane.b32.xlu0 %v467, 32
        %v1135 = vpop.permute.xlu0 %1134
        %1136 = vrot.lane.b32.xlu0 %v469, 32
        %v1137 = vpop.permute.xlu0 %1136
        %1138 = vrot.lane.b32.xlu0 %v472, 32
        %v1139 = vpop.permute.xlu0 %1138
        %1140 = vrot.lane.b32.xlu0 %v474, 32
        %v1141 = vpop.permute.xlu0 %1140
        %1142 = vrot.lane.b32.xlu0 %v477, 32
        %v1143 = vpop.permute.xlu0 %1142
        %1144 = vrot.lane.b32.xlu0 %v479, 32
        %v1145 = vpop.permute.xlu0 %1144
        %1146 = vrot.lane.b32.xlu0 %v482, 32
        %v1147 = vpop.permute.xlu0 %1146
        %1148 = vrot.lane.b32.xlu0 %v484, 32
        %v1149 = vpop.permute.xlu0 %1148
        %1150 = vrot.lane.b32.xlu0 %v487, 32
        %v1151 = vpop.permute.xlu0 %1150
        %1152 = vrot.lane.b32.xlu0 %v489, 32
        %v1153 = vpop.permute.xlu0 %1152
        %1154 = vrot.lane.b32.xlu0 %v492, 32
        %v1155 = vpop.permute.xlu0 %1154
        %1156 = vrot.lane.b32.xlu0 %v494, 32
        %v1157 = vpop.permute.xlu0 %1156
        %1158 = vrot.lane.b32.xlu0 %v497, 32
        %v1159 = vpop.permute.xlu0 %1158
        %1160 = vrot.lane.b32.xlu0 %v499, 32
        %v1161 = vpop.permute.xlu0 %1160
        %1162 = vrot.lane.b32.xlu0 %v502, 32
        %v1163 = vpop.permute.xlu0 %1162
        %1164 = vrot.lane.b32.xlu0 %v504, 32
        %v1165 = vpop.permute.xlu0 %1164
        %1166 = vrot.lane.b32.xlu0 %v507, 32
        %v1167 = vpop.permute.xlu0 %1166
        %1168 = vrot.lane.b32.xlu0 %v509, 32
        %v1169 = vpop.permute.xlu0 %1168
        %1170 = vrot.lane.b32.xlu0 %v512, 32
        %v1171 = vpop.permute.xlu0 %1170
        %1172 = vrot.lane.b32.xlu0 %v514, 32
        %v1173 = vpop.permute.xlu0 %1172
        %1174 = vrot.lane.b32.xlu0 %v517, 32
        %v1175 = vpop.permute.xlu0 %1174
        %1176 = vrot.lane.b32.xlu0 %v519, 32
        %v1177 = vpop.permute.xlu0 %1176
        %1178 = vrot.lane.b32.xlu0 %v818, 32
        %v1179 = vpop.permute.xlu0 %1178
        %1180 = vrot.lane.b32.xlu0 %v820, 32
        %v1181 = vpop.permute.xlu0 %1180
        %1182 = vrot.lane.b32.xlu0 %v1119, 32
        %v1183 = vpop.permute.xlu0 %1182
        %1184 = vrot.lane.b32.xlu0 %v1121, 32
        %v1185 = vpop.permute.xlu0 %1184
        %vm1218 = vcmask 31744
        %v1219 = vsel %vm1218, %v160, %v344
        %v1220 = vsel %vm1218, %v161, %v346
        %v1221 = vsel %vm1218, %v163, %v348
        %v1222 = vsel %vm1218, %v164, %v350
        %v1223 = vsel %vm1218, %v166, %v352
        %v1224 = vsel %vm1218, %v167, %v354
        %v1225 = vsel %vm1218, %v169, %v356
        %v1226 = vsel %vm1218, %v170, %v358
        %v1227 = vsel %vm1218, %v172, %v360
        %v1228 = vsel %vm1218, %v173, %v362
        %v1229 = vsel %vm1218, %v175, %v364
        %v1230 = vsel %vm1218, %v176, %v366
        %v1231 = vsel %vm1218, %v178, %v368
        %v1232 = vsel %vm1218, %v179, %v370
        %v1233 = vsel %vm1218, %v181, %v372
        %v1234 = vsel %vm1218, %v182, %v374
        %v1235 = vsel %vm1218, %v184, %v376
        %v1236 = vsel %vm1218, %v185, %v378
        %v1237 = vsel %vm1218, %v187, %v380
        %v1238 = vsel %vm1218, %v188, %v382
        %v1239 = vsel %vm1218, %v190, %v384
        %v1240 = vsel %vm1218, %v191, %v386
        %v1241 = vsel %vm1218, %v193, %v388
        %v1242 = vsel %vm1218, %v194, %v390
        %v1243 = vsel %vm1218, %v196, %v392
        %v1244 = vsel %vm1218, %v197, %v394
        %v1245 = vsel %vm1218, %v199, %v396
        %v1246 = vsel %vm1218, %v200, %v398
        %v1247 = vsel %vm1218, %v202, %v400
        %v1248 = vsel %vm1218, %v203, %v402
        %v1249 = vsel %vm1218, %v205, %v404
        %v1250 = vsel %vm1218, %v206, %v406
        %vm1251 = vcmask 64512
        %v1252 = vsel %vm1251, %v1219, %v521
        %v1253 = vsel %vm1251, %v1220, %v523
        %v1254 = vsel %vm1251, %v1221, %v525
        %v1255 = vsel %vm1251, %v1222, %v527
        %v1256 = vsel %vm1251, %v1223, %v529
        %v1257 = vsel %vm1251, %v1224, %v531
        %v1258 = vsel %vm1251, %v1225, %v533
        %v1259 = vsel %vm1251, %v1226, %v535
        %v1260 = vsel %vm1251, %v1227, %v537
        %v1261 = vsel %vm1251, %v1228, %v539
        %v1262 = vsel %vm1251, %v1229, %v541
        %v1263 = vsel %vm1251, %v1230, %v543
        %v1264 = vsel %vm1251, %v1231, %v545
        %v1265 = vsel %vm1251, %v1232, %v547
        %v1266 = vsel %vm1251, %v1233, %v549
        %v1267 = vsel %vm1251, %v1234, %v551
        %v1268 = vsel %vm1251, %v1235, %v553
        %v1269 = vsel %vm1251, %v1236, %v555
        %v1270 = vsel %vm1251, %v1237, %v557
        %v1271 = vsel %vm1251, %v1238, %v559
        %v1272 = vsel %vm1251, %v1239, %v561
        %v1273 = vsel %vm1251, %v1240, %v563
        %v1274 = vsel %vm1251, %v1241, %v565
        %v1275 = vsel %vm1251, %v1242, %v567
        %v1276 = vsel %vm1251, %v1243, %v569
        %v1277 = vsel %vm1251, %v1244, %v571
        %v1278 = vsel %vm1251, %v1245, %v573
        %v1279 = vsel %vm1251, %v1246, %v575
        %v1280 = vsel %vm1251, %v1247, %v577
        %v1281 = vsel %vm1251, %v1248, %v579
        %v1282 = vsel %vm1251, %v1249, %v581
        %v1283 = vsel %vm1251, %v1250, %v583
        %vm1284 = vcmask 97280
        %v1285 = vsel %vm1284, %v1252, %v619
        %v1286 = vsel %vm1284, %v1253, %v621
        %v1287 = vsel %vm1284, %v1254, %v623
        %v1288 = vsel %vm1284, %v1255, %v625
        %v1289 = vsel %vm1284, %v1256, %v627
        %v1290 = vsel %vm1284, %v1257, %v629
        %v1291 = vsel %vm1284, %v1258, %v631
        %v1292 = vsel %vm1284, %v1259, %v633
        %v1293 = vsel %vm1284, %v1260, %v635
        %v1294 = vsel %vm1284, %v1261, %v637
        %v1295 = vsel %vm1284, %v1262, %v639
        %v1296 = vsel %vm1284, %v1263, %v641
        %v1297 = vsel %vm1284, %v1264, %v643
        %v1298 = vsel %vm1284, %v1265, %v645
        %v1299 = vsel %vm1284, %v1266, %v647
        %v1300 = vsel %vm1284, %v1267, %v649
        %v1301 = vsel %vm1284, %v1268, %v651
        %v1302 = vsel %vm1284, %v1269, %v653
        %v1303 = vsel %vm1284, %v1270, %v655
        %v1304 = vsel %vm1284, %v1271, %v657
        %v1305 = vsel %vm1284, %v1272, %v659
        %v1306 = vsel %vm1284, %v1273, %v661
        %v1307 = vsel %vm1284, %v1274, %v663
        %v1308 = vsel %vm1284, %v1275, %v665
        %v1309 = vsel %vm1284, %v1276, %v667
        %v1310 = vsel %vm1284, %v1277, %v669
        %v1311 = vsel %vm1284, %v1278, %v671
        %v1312 = vsel %vm1284, %v1279, %v673
        %v1313 = vsel %vm1284, %v1280, %v675
        %v1314 = vsel %vm1284, %v1281, %v677
        %v1315 = vsel %vm1284, %v1282, %v679
        %v1316 = vsel %vm1284, %v1283, %v681
        %vm1317 = vcmask 130048
        %v1318 = vsel %vm1317, %v1285, %v721
        %v1319 = vsel %vm1317, %v1286, %v723
        %v1320 = vsel %vm1317, %v1287, %v725
        %v1321 = vsel %vm1317, %v1288, %v727
        %v1322 = vsel %vm1317, %v1289, %v729
        %v1323 = vsel %vm1317, %v1290, %v731
        %v1324 = vsel %vm1317, %v1291, %v733
        %v1325 = vsel %vm1317, %v1292, %v735
        %v1326 = vsel %vm1317, %v1293, %v737
        %v1327 = vsel %vm1317, %v1294, %v739
        %v1328 = vsel %vm1317, %v1295, %v741
        %v1329 = vsel %vm1317, %v1296, %v743
        %v1330 = vsel %vm1317, %v1297, %v745
        %v1331 = vsel %vm1317, %v1298, %v747
        %v1332 = vsel %vm1317, %v1299, %v749
        %v1333 = vsel %vm1317, %v1300, %v751
        %v1334 = vsel %vm1317, %v1301, %v753
        %v1335 = vsel %vm1317, %v1302, %v755
        %v1336 = vsel %vm1317, %v1303, %v757
        %v1337 = vsel %vm1317, %v1304, %v759
        %v1338 = vsel %vm1317, %v1305, %v761
        %v1339 = vsel %vm1317, %v1306, %v763
        %v1340 = vsel %vm1317, %v1307, %v765
        %v1341 = vsel %vm1317, %v1308, %v767
        %v1342 = vsel %vm1317, %v1309, %v769
        %v1343 = vsel %vm1317, %v1310, %v771
        %v1344 = vsel %vm1317, %v1311, %v773
        %v1345 = vsel %vm1317, %v1312, %v775
        %v1346 = vsel %vm1317, %v1313, %v777
        %v1347 = vsel %vm1317, %v1314, %v779
        %v1348 = vsel %vm1317, %v1315, %v781
        %v1349 = vsel %vm1317, %v1316, %v783
        %vm1350 = vcmask 162816
        %v1351 = vsel %vm1350, %v1318, %v822
        %v1352 = vsel %vm1350, %v1319, %v824
        %v1353 = vsel %vm1350, %v1320, %v826
        %v1354 = vsel %vm1350, %v1321, %v828
        %v1355 = vsel %vm1350, %v1322, %v830
        %v1356 = vsel %vm1350, %v1323, %v832
        %v1357 = vsel %vm1350, %v1324, %v834
        %v1358 = vsel %vm1350, %v1325, %v836
        %v1359 = vsel %vm1350, %v1326, %v838
        %v1360 = vsel %vm1350, %v1327, %v840
        %v1361 = vsel %vm1350, %v1328, %v842
        %v1362 = vsel %vm1350, %v1329, %v844
        %v1363 = vsel %vm1350, %v1330, %v846
        %v1364 = vsel %vm1350, %v1331, %v848
        %v1365 = vsel %vm1350, %v1332, %v850
        %v1366 = vsel %vm1350, %v1333, %v852
        %v1367 = vsel %vm1350, %v1334, %v854
        %v1368 = vsel %vm1350, %v1335, %v856
        %v1369 = vsel %vm1350, %v1336, %v858
        %v1370 = vsel %vm1350, %v1337, %v860
        %v1371 = vsel %vm1350, %v1338, %v862
        %v1372 = vsel %vm1350, %v1339, %v864
        %v1373 = vsel %vm1350, %v1340, %v866
        %v1374 = vsel %vm1350, %v1341, %v868
        %v1375 = vsel %vm1350, %v1342, %v870
        %v1376 = vsel %vm1350, %v1343, %v872
        %v1377 = vsel %vm1350, %v1344, %v874
        %v1378 = vsel %vm1350, %v1345, %v876
        %v1379 = vsel %vm1350, %v1346, %v878
        %v1380 = vsel %vm1350, %v1347, %v880
        %v1381 = vsel %vm1350, %v1348, %v882
        %v1382 = vsel %vm1350, %v1349, %v884
        %vm1383 = vcmask 195584
        %v1384 = vsel %vm1383, %v1351, %v920
        %v1385 = vsel %vm1383, %v1352, %v922
        %v1386 = vsel %vm1383, %v1353, %v924
        %v1387 = vsel %vm1383, %v1354, %v926
        %v1388 = vsel %vm1383, %v1355, %v928
        %v1389 = vsel %vm1383, %v1356, %v930
        %v1390 = vsel %vm1383, %v1357, %v932
        %v1391 = vsel %vm1383, %v1358, %v934
        %v1392 = vsel %vm1383, %v1359, %v936
        %v1393 = vsel %vm1383, %v1360, %v938
        %v1394 = vsel %vm1383, %v1361, %v940
        %v1395 = vsel %vm1383, %v1362, %v942
        %v1396 = vsel %vm1383, %v1363, %v944
        %v1397 = vsel %vm1383, %v1364, %v946
        %v1398 = vsel %vm1383, %v1365, %v948
        %v1399 = vsel %vm1383, %v1366, %v950
        %v1400 = vsel %vm1383, %v1367, %v952
        %v1401 = vsel %vm1383, %v1368, %v954
        %v1402 = vsel %vm1383, %v1369, %v956
        %v1403 = vsel %vm1383, %v1370, %v958
        %v1404 = vsel %vm1383, %v1371, %v960
        %v1405 = vsel %vm1383, %v1372, %v962
        %v1406 = vsel %vm1383, %v1373, %v964
        %v1407 = vsel %vm1383, %v1374, %v966
        %v1408 = vsel %vm1383, %v1375, %v968
        %v1409 = vsel %vm1383, %v1376, %v970
        %v1410 = vsel %vm1383, %v1377, %v972
        %v1411 = vsel %vm1383, %v1378, %v974
        %v1412 = vsel %vm1383, %v1379, %v976
        %v1413 = vsel %vm1383, %v1380, %v978
        %v1414 = vsel %vm1383, %v1381, %v980
        %v1415 = vsel %vm1383, %v1382, %v982
        %vm1416 = vcmask 228352
        %v1417 = vsel %vm1416, %v1384, %v1022
        %v1418 = vsel %vm1416, %v1385, %v1024
        %v1419 = vsel %vm1416, %v1386, %v1026
        %v1420 = vsel %vm1416, %v1387, %v1028
        %v1421 = vsel %vm1416, %v1388, %v1030
        %v1422 = vsel %vm1416, %v1389, %v1032
        %v1423 = vsel %vm1416, %v1390, %v1034
        %v1424 = vsel %vm1416, %v1391, %v1036
        %v1425 = vsel %vm1416, %v1392, %v1038
        %v1426 = vsel %vm1416, %v1393, %v1040
        %v1427 = vsel %vm1416, %v1394, %v1042
        %v1428 = vsel %vm1416, %v1395, %v1044
        %v1429 = vsel %vm1416, %v1396, %v1046
        %v1430 = vsel %vm1416, %v1397, %v1048
        %v1431 = vsel %vm1416, %v1398, %v1050
        %v1432 = vsel %vm1416, %v1399, %v1052
        %v1433 = vsel %vm1416, %v1400, %v1054
        %v1434 = vsel %vm1416, %v1401, %v1056
        %v1435 = vsel %vm1416, %v1402, %v1058
        %v1436 = vsel %vm1416, %v1403, %v1060
        %v1437 = vsel %vm1416, %v1404, %v1062
        %v1438 = vsel %vm1416, %v1405, %v1064
        %v1439 = vsel %vm1416, %v1406, %v1066
        %v1440 = vsel %vm1416, %v1407, %v1068
        %v1441 = vsel %vm1416, %v1408, %v1070
        %v1442 = vsel %vm1416, %v1409, %v1072
        %v1443 = vsel %vm1416, %v1410, %v1074
        %v1444 = vsel %vm1416, %v1411, %v1076
        %v1445 = vsel %vm1416, %v1412, %v1078
        %v1446 = vsel %vm1416, %v1413, %v1080
        %v1447 = vsel %vm1416, %v1414, %v1082
        %v1448 = vsel %vm1416, %v1415, %v1084
        %vm1449 = vcmask 261120
        %v1450 = vsel %vm1449, %v1417, %v1123
        %v1451 = vsel %vm1449, %v1418, %v1125
        %v1452 = vsel %vm1449, %v1419, %v1127
        %v1453 = vsel %vm1449, %v1420, %v1129
        %v1454 = vsel %vm1449, %v1421, %v1131
        %v1455 = vsel %vm1449, %v1422, %v1133
        %v1456 = vsel %vm1449, %v1423, %v1135
        %v1457 = vsel %vm1449, %v1424, %v1137
        %v1458 = vsel %vm1449, %v1425, %v1139
        %v1459 = vsel %vm1449, %v1426, %v1141
        %v1460 = vsel %vm1449, %v1427, %v1143
        %v1461 = vsel %vm1449, %v1428, %v1145
        %v1462 = vsel %vm1449, %v1429, %v1147
        %v1463 = vsel %vm1449, %v1430, %v1149
        %v1464 = vsel %vm1449, %v1431, %v1151
        %v1465 = vsel %vm1449, %v1432, %v1153
        %v1466 = vsel %vm1449, %v1433, %v1155
        %v1467 = vsel %vm1449, %v1434, %v1157
        %v1468 = vsel %vm1449, %v1435, %v1159
        %v1469 = vsel %vm1449, %v1436, %v1161
        %v1470 = vsel %vm1449, %v1437, %v1163
        %v1471 = vsel %vm1449, %v1438, %v1165
        %v1472 = vsel %vm1449, %v1439, %v1167
        %v1473 = vsel %vm1449, %v1440, %v1169
        %v1474 = vsel %vm1449, %v1441, %v1171
        %v1475 = vsel %vm1449, %v1442, %v1173
        %v1476 = vsel %vm1449, %v1443, %v1175
        %v1477 = vsel %vm1449, %v1444, %v1177
        %v1478 = vsel %vm1449, %v1445, %v1179
        %v1479 = vsel %vm1449, %v1446, %v1181
        %v1480 = vsel %vm1449, %v1447, %v1183
        %v1481 = vsel %vm1449, %v1448, %v1185
        %v1482 = vld [vmem:[%s1] sm:$0xff]
        %v1483 = vld [vmem:[%s1 + $0x8] sm:$0xff]
        %v1484 = vld [vmem:[%s1 + $0x10] sm:$0xff]
        %v1485 = vld [vmem:[%s1 + $0x18] sm:$0xff]
        %v1486 = vld [vmem:[%s1 + $0x20] sm:$0xf]
        %vm1487 = vcmask 293888
        %v1489 = vsel %vm1487, %v1450, 0
        %v1492 = vsel %vm1487, %v1451, 0
        %v1495 = vsel %vm1487, %v1452, 0
        %v1498 = vsel %vm1487, %v1453, 0
        %v1501 = vsel %vm1487, %v1454, 0
        %v1504 = vsel %vm1487, %v1455, 0
        %v1507 = vsel %vm1487, %v1456, 0
        %v1510 = vsel %vm1487, %v1457, 0
        %v1513 = vsel %vm1487, %v1458, 0
        %v1516 = vsel %vm1487, %v1459, 0
        %v1519 = vsel %vm1487, %v1460, 0
        %v1522 = vsel %vm1487, %v1461, 0
        %v1525 = vsel %vm1487, %v1462, 0
        %v1528 = vsel %vm1487, %v1463, 0
        %v1531 = vsel %vm1487, %v1464, 0
        %v1534 = vsel %vm1487, %v1465, 0
        %v1537 = vsel %vm1487, %v1466, 0
        %v1540 = vsel %vm1487, %v1467, 0
        %v1543 = vsel %vm1487, %v1468, 0
        %v1546 = vsel %vm1487, %v1469, 0
        %v1549 = vsel %vm1487, %v1470, 0
        %v1552 = vsel %vm1487, %v1471, 0
        %v1555 = vsel %vm1487, %v1472, 0
        %v1558 = vsel %vm1487, %v1473, 0
        %v1561 = vsel %vm1487, %v1474, 0
        %v1564 = vsel %vm1487, %v1475, 0
        %v1567 = vsel %vm1487, %v1476, 0
        %v1570 = vsel %vm1487, %v1477, 0
        %v1573 = vsel %vm1487, %v1478, 0
        %v1576 = vsel %vm1487, %v1479, 0
        %v1579 = vsel %vm1487, %v1480, 0
        %v1582 = vsel %vm1487, %v1481, 0
        %vm1584 = vcmask 1043456
        %v1586 = vsel %vm1584, %v1486, 0
        %1588 = vmatpush.msra.mxu0 0.0
        %1589 = vmatpush.msra.mxu0 0.0
        %1590 = vmatpush.msra.mxu0 0.0
        %1591 = vmatpush.msra.mxu0 0.0
        %1592 = vmatpush.msra.mxu0 0.0
        %1593 = vmatpush.msra.mxu0 0.0
        %1594 = vmatpush.msra.mxu0 0.0
        %1595 = vmatpush.msra.mxu0 0.0
        %1596 = vmatpush.msra.mxu0 0.0
        %1597 = vmatpush.msra.mxu0 0.0
        %1598 = vmatpush.msra.mxu0 0.0
        %1599 = vmatpush.msra.mxu0 %v1586
        %1600 = vmatpush.msra.mxu0 %v1485
        %1601 = vmatpush.msra.mxu0 %v1484
        %1602 = vmatpush.msra.mxu0 %v1483
        %1603 = vmatpush.msra.mxu0 %v1482
        %1604 = vmatmul.f32.gmra.mxu0 %v1489
        %v1605 = vpop.f32.mrf.mxu0
        %v1606 = vadd.f32 0.0, %v1605
        %1607 = vmatmul.f32.gmra.mxu0 %v1492
        %v1608 = vpop.f32.mrf.mxu0
        %v1609 = vadd.f32 0.0, %v1608
        %1610 = vmatmul.f32.gmra.mxu0 %v1495
        %v1611 = vpop.f32.mrf.mxu0
        %v1612 = vadd.f32 0.0, %v1611
        %1613 = vmatmul.f32.gmra.mxu0 %v1498
        %v1614 = vpop.f32.mrf.mxu0
        %v1615 = vadd.f32 0.0, %v1614
        %1616 = vmatmul.f32.gmra.mxu0 %v1501
        %v1617 = vpop.f32.mrf.mxu0
        %v1618 = vadd.f32 0.0, %v1617
        %1619 = vmatmul.f32.gmra.mxu0 %v1504
        %v1620 = vpop.f32.mrf.mxu0
        %v1621 = vadd.f32 0.0, %v1620
        %1622 = vmatmul.f32.gmra.mxu0 %v1507
        %v1623 = vpop.f32.mrf.mxu0
        %v1624 = vadd.f32 0.0, %v1623
        %1625 = vmatmul.f32.gmra.mxu0 %v1510
        %v1626 = vpop.f32.mrf.mxu0
        %v1627 = vadd.f32 0.0, %v1626
        %1628 = vmatmul.f32.gmra.mxu0 %v1513
        %v1629 = vpop.f32.mrf.mxu0
        %v1630 = vadd.f32 0.0, %v1629
        %1631 = vmatmul.f32.gmra.mxu0 %v1516
        %v1632 = vpop.f32.mrf.mxu0
        %v1633 = vadd.f32 0.0, %v1632
        %1634 = vmatmul.f32.gmra.mxu0 %v1519
        %v1635 = vpop.f32.mrf.mxu0
        %v1636 = vadd.f32 0.0, %v1635
        %1637 = vmatmul.f32.gmra.mxu0 %v1522
        %v1638 = vpop.f32.mrf.mxu0
        %v1639 = vadd.f32 0.0, %v1638
        %1640 = vmatmul.f32.gmra.mxu0 %v1525
        %v1641 = vpop.f32.mrf.mxu0
        %v1642 = vadd.f32 0.0, %v1641
        %1643 = vmatmul.f32.gmra.mxu0 %v1528
        %v1644 = vpop.f32.mrf.mxu0
        %v1645 = vadd.f32 0.0, %v1644
        %1646 = vmatmul.f32.gmra.mxu0 %v1531
        %v1647 = vpop.f32.mrf.mxu0
        %v1648 = vadd.f32 0.0, %v1647
        %1649 = vmatmul.f32.gmra.mxu0 %v1534
        %v1650 = vpop.f32.mrf.mxu0
        %v1651 = vadd.f32 0.0, %v1650
        %1652 = vmatmul.f32.gmra.mxu0 %v1537
        %v1653 = vpop.f32.mrf.mxu0
        %v1654 = vadd.f32 0.0, %v1653
        %1655 = vmatmul.f32.gmra.mxu0 %v1540
        %v1656 = vpop.f32.mrf.mxu0
        %v1657 = vadd.f32 0.0, %v1656
        %1658 = vmatmul.f32.gmra.mxu0 %v1543
        %v1659 = vpop.f32.mrf.mxu0
        %v1660 = vadd.f32 0.0, %v1659
        %1661 = vmatmul.f32.gmra.mxu0 %v1546
        %v1662 = vpop.f32.mrf.mxu0
        %v1663 = vadd.f32 0.0, %v1662
        %1664 = vmatmul.f32.gmra.mxu0 %v1549
        %v1665 = vpop.f32.mrf.mxu0
        %v1666 = vadd.f32 0.0, %v1665
        %1667 = vmatmul.f32.gmra.mxu0 %v1552
        %v1668 = vpop.f32.mrf.mxu0
        %v1669 = vadd.f32 0.0, %v1668
        %1670 = vmatmul.f32.gmra.mxu0 %v1555
        %v1671 = vpop.f32.mrf.mxu0
        %v1672 = vadd.f32 0.0, %v1671
        %1673 = vmatmul.f32.gmra.mxu0 %v1558
        %v1674 = vpop.f32.mrf.mxu0
        %v1675 = vadd.f32 0.0, %v1674
        %1676 = vmatmul.f32.gmra.mxu0 %v1561
        %v1677 = vpop.f32.mrf.mxu0
        %v1678 = vadd.f32 0.0, %v1677
        %1679 = vmatmul.f32.gmra.mxu0 %v1564
        %v1680 = vpop.f32.mrf.mxu0
        %v1681 = vadd.f32 0.0, %v1680
        %1682 = vmatmul.f32.gmra.mxu0 %v1567
        %v1683 = vpop.f32.mrf.mxu0
        %v1684 = vadd.f32 0.0, %v1683
        %1685 = vmatmul.f32.gmra.mxu0 %v1570
        %v1686 = vpop.f32.mrf.mxu0
        %v1687 = vadd.f32 0.0, %v1686
        %1688 = vmatmul.f32.gmra.mxu0 %v1573
        %v1689 = vpop.f32.mrf.mxu0
        %v1690 = vadd.f32 0.0, %v1689
        %1691 = vmatmul.f32.gmra.mxu0 %v1576
        %v1692 = vpop.f32.mrf.mxu0
        %v1693 = vadd.f32 0.0, %v1692
        %1694 = vmatmul.f32.gmra.mxu0 %v1579
        %v1695 = vpop.f32.mrf.mxu0
        %v1696 = vadd.f32 0.0, %v1695
        %1697 = vmatmul.f32.gmra.mxu0 %v1582
        %v1698 = vpop.f32.mrf.mxu0
        %v1699 = vadd.f32 0.0, %v1698
        %1700 = vdwg.mxu0
        %1701 = vst [vmem:[%s150] sm:$0xff] %v1606
        %1702 = vst [vmem:[%s150 + $0x8] sm:$0xff] %v1609
        %1703 = vst [vmem:[%s150 + $0x10] sm:$0xff] %v1612
        %1704 = vst [vmem:[%s150 + $0x18] sm:$0xff] %v1615
        %1705 = vst [vmem:[%s150 + $0x20] sm:$0xff] %v1618
        %1706 = vst [vmem:[%s150 + $0x28] sm:$0xff] %v1621
        %1707 = vst [vmem:[%s150 + $0x30] sm:$0xff] %v1624
        %1708 = vst [vmem:[%s150 + $0x38] sm:$0xff] %v1627
        %1709 = vst [vmem:[%s150 + $0x40] sm:$0xff] %v1630
        %1710 = vst [vmem:[%s150 + $0x48] sm:$0xff] %v1633
        %1711 = vst [vmem:[%s150 + $0x50] sm:$0xff] %v1636
        %1712 = vst [vmem:[%s150 + $0x58] sm:$0xff] %v1639
        %1713 = vst [vmem:[%s150 + $0x60] sm:$0xff] %v1642
        %1714 = vst [vmem:[%s150 + $0x68] sm:$0xff] %v1645
        %1715 = vst [vmem:[%s150 + $0x70] sm:$0xff] %v1648
        %1716 = vst [vmem:[%s150 + $0x78] sm:$0xff] %v1651
        %1717 = vst [vmem:[%s150 + $0x80] sm:$0xff] %v1654
        %1718 = vst [vmem:[%s150 + $0x88] sm:$0xff] %v1657
        %1719 = vst [vmem:[%s150 + $0x90] sm:$0xff] %v1660
        %1720 = vst [vmem:[%s150 + $0x98] sm:$0xff] %v1663
        %1721 = vst [vmem:[%s150 + $0xa0] sm:$0xff] %v1666
        %1722 = vst [vmem:[%s150 + $0xa8] sm:$0xff] %v1669
        %1723 = vst [vmem:[%s150 + $0xb0] sm:$0xff] %v1672
        %1724 = vst [vmem:[%s150 + $0xb8] sm:$0xff] %v1675
        %1725 = vst [vmem:[%s150 + $0xc0] sm:$0xff] %v1678
        %1726 = vst [vmem:[%s150 + $0xc8] sm:$0xff] %v1681
        %1727 = vst [vmem:[%s150 + $0xd0] sm:$0xff] %v1684
        %1728 = vst [vmem:[%s150 + $0xd8] sm:$0xff] %v1687
        %1729 = vst [vmem:[%s150 + $0xe0] sm:$0xff] %v1690
        %1730 = vst [vmem:[%s150 + $0xe8] sm:$0xff] %v1693
        %1731 = vst [vmem:[%s150 + $0xf0] sm:$0xff] %v1696
        %1732 = vst [vmem:[%s150 + $0xf8] sm:$0xff] %v1699
        %s1733 = sand.u32 %s85, 1
        %s1734 = scalar_lea.sflag [#allocation3], %s1733
        %s1735 = sand.u32 %s85, 1
        %s1736 = smul.addr %s1735, 256
        %s1737 = scalar_lea.vmem [#allocation2], %s1736
        // Predicated region
        $region29: #{tpu_custom_call.1} parent=27 // pred_check
          %p1738 = pneg %p95
        $region30: #{tpu_custom_call.1} parent=27 // pred_check_branch
          %1740 = sbr.rel (%p1738) target = $region32
        $region31: #{tpu_custom_call.1} parent=27 // pred_region
          %s1741 = smul.u32 16, %s21
          %1743 = vsyncadd %s1734, 0
          %s1744 = smul.addr %s1741, 2
          %s1745 = smul.addr %s20, 32
          %s1746 = sadd.s32 %s1744, %s1745
          %s1747 = smul.addr %s1746, 8
          %s1748 = scalar_lea.hbm %s2, %s1747
          %s1749 = sshll.u32 %s1737, 4
          %s1750 = int_to_ptr.vmem [resolvable:$true] %s1749
          %s1751 = sshll.u32 %s1748, 4
          %s1752 = int_to_ptr.hbm [resolvable:$true] %s1751
          %1757 = dma.vmem_to_hbm [thread:$0]  %s1750, 4096, %s1752, %s1734, 128, 128, 8
        $region32: #{tpu_custom_call.1} parent=27 // pred_fallthru
          _
      $region28: #{tpu_custom_call.1} parent=5 // pred_fallthru
        _
      %p1758 = scmp.le.s32.totalorder 2, %s11
      // Predicated region
      $region33: #{tpu_custom_call.1} parent=5 // pred_check
        %p1759 = pneg %p1758
      $region34: #{tpu_custom_call.1} parent=5 // pred_check_branch
        %1761 = sbr.rel (%p1759) target = $region36
      $region35: #{tpu_custom_call.1} parent=5 // pred_region
        %s1762 = ssub.s32 %s11, 2
        // Predicated region
        $region37: #{tpu_custom_call.1} parent=35 // pred_check
          %p1763 = pneg %p101
        $region38: #{tpu_custom_call.1} parent=35 // pred_check_branch
          %1765 = sbr.rel (%p1763) target = $region40
        $region39: #{tpu_custom_call.1} parent=35 // pred_region
          %s1766 = sand.u32 %s86, 1
          %s1767 = scalar_lea.sflag [#allocation3], %s1766
          %s1768 = sand.u32 %s86, 1
          %s1769 = smul.addr %s1768, 256
          %s1770 = scalar_lea.vmem [#allocation2], %s1769
          %1772 = dma.done %s1767, 4096
        $region40: #{tpu_custom_call.1} parent=35 // pred_fallthru
          _
      $region36: #{tpu_custom_call.1} parent=5 // pred_fallthru
        _
    $region6: #{tpu_custom_call.1} parent=1 // loop_footer
      %s15 = sadd.s32 1, %s11
    $region7: #{tpu_custom_call.1} parent=1 // loop_footer_branch
      %10 = sbr.rel target = $region3
    $region8: #{tpu_custom_call.1} parent=1 // loop_exit
      _
    %1773 = vsyncpa [#allocation3], 1
    %s1774 = scalar_lea.sflag [#allocation3], 1
    %1775 = vsyncpa %s1774, 1

</llo_original>
